<compile_context>
chip_gen: v7x
topology: tpu7x:2x2x1
jax: 0.10.0
libtpu: 0.0.40
codegen_flags: <defaults>
</compile_context>

<pallas_src>
import functools

import jax
import jax.numpy as jnp
from jax.experimental import pallas as pl
from jax.experimental.pallas import tpu as pltpu


def _round_up(x, m):
    return (x + m - 1) // m * m


# ---------------------------------------------------------------------------
# Generation-aware VMEM budgeting / grid-step policy
# ---------------------------------------------------------------------------
def _chip_kind():
    try:
        return jax.devices()[0].device_kind.lower()
    except Exception:
        return ""


_KIND = _chip_kind()
if "v7" in _KIND:                       # 64 MiB physical VMEM, 2 TensorCores
    _VMEM_LIMIT = 48 << 20
    _VMEM_BUDGET = 36 << 20
    _MIN_GRID_STEPS = 4                 # >= 2 steps per core
elif ("v5" in _KIND) or ("v6" in _KIND):  # 128 MiB physical VMEM, 1 TensorCore
    _VMEM_LIMIT = 64 << 20
    _VMEM_BUDGET = 48 << 20
    _MIN_GRID_STEPS = 2
else:                                   # unknown chip: stay conservative
    _VMEM_LIMIT = None
    _VMEM_BUDGET = 24 << 20
    _MIN_GRID_STEPS = 2

_BIG_WEIGHT = 1 << 20                   # >1 MiB weight -> insist on pipelining
_SLACK = 2 << 20                        # Mosaic internal scratch / misc


# ---------------------------------------------------------------------------
# Fused-im2col kernel: sum of row-shifted GEMMs, bias + optional ReLU epilogue
# ---------------------------------------------------------------------------
def _fused_conv_kernel(x_ref, w_ref, b_ref, o_ref, acc_ref, *, offsets,
                       apply_relu):
    """x_ref: (rows, Cin_p) flattened padded activation (full image in VMEM).
    w_ref: (P*T, Cin_p, TN) per-tap weight slices.  o_ref: (P, Mp, TN).
    offsets[p][t] is the static row shift of tap t for output parity p."""
    mp = acc_ref.shape[0]
    taps = len(offsets[0])
    for p, offs in enumerate(offsets):
        for ti, off in enumerate(offs):
            a = x_ref[pl.ds(off, mp), :]
            contrib = jnp.dot(a, w_ref[p * taps + ti],
                              preferred_element_type=jnp.float32)
            if ti == 0:
                acc_ref[...] = contrib
            else:
                acc_ref[...] += contrib
        r = acc_ref[...] + b_ref[...]
        if apply_relu:
            r = jnp.maximum(r, 0.0)
        o_ref[p, :, :] = r.astype(o_ref.dtype)


def _fused_tn(n_p, pt, cin_p, mp, rows, n_par):
    """Output-tile width for the fused path: widest multiple of 128 dividing
    Np that fits the VMEM budget, forcing >= _MIN_GRID_STEPS grid steps when
    the weight is big enough for the exposed DMA to matter."""
    cands = [t for t in range(128, n_p + 1, 128) if n_p % t == 0]
    cands.sort(reverse=True)
    w_total = pt * cin_p * n_p * 2

    def fits(tn):
        ws = (2 * rows * cin_p * 2          # activation (double-buffered bound)
              + 2 * pt * cin_p * tn * 2     # weight tile, double-buffered
              + 2 * n_par * mp * tn * 2     # output tile, double-buffered
              + mp * tn * 4                 # f32 accumulator scratch
              + 2 * 4 * tn                  # bias tile
              + _SLACK)
        return ws <= _VMEM_BUDGET

    for tn in cands:
        if not fits(tn):
            continue
        if (w_total <= _BIG_WEIGHT or n_p // tn >= _MIN_GRID_STEPS
                or tn == cands[-1]):
            return tn
    return cands[-1]


def _fused_conv_call(xf, wstack, bias, offsets, mp, apply_relu):
    """xf: (N, rows, Cin_p) bf16.  wstack: (P*T, Cin_p, Np) bf16.
    bias: (1, Np) f32.  Returns (N, P, Mp, Np) bf16."""
    n, rows, cin_p = xf.shape
    pt, _, n_p = wstack.shape
    n_par = len(offsets)
    tn = _fused_tn(n_p, pt, cin_p, mp, rows, n_par)
    grid = (n, n_p // tn)
    kernel = functools.partial(_fused_conv_kernel, offsets=offsets,
                               apply_relu=apply_relu)
    return pl.pallas_call(
        kernel,
        out_shape=jax.ShapeDtypeStruct((n, n_par, mp, n_p), jnp.bfloat16),
        grid_spec=pltpu.PrefetchScalarGridSpec(
            num_scalar_prefetch=0,
            grid=grid,
            in_specs=[
                pl.BlockSpec((None, rows, cin_p), lambda b, j: (b, 0, 0)),
                pl.BlockSpec((pt, cin_p, tn), lambda b, j: (0, 0, j)),
                pl.BlockSpec((1, tn), lambda b, j: (0, j)),
            ],
            out_specs=pl.BlockSpec((None, n_par, mp, tn),
                                   lambda b, j: (b, 0, 0, j)),
            scratch_shapes=[pltpu.VMEM((mp, tn), jnp.float32)],
        ),
        compiler_params=pltpu.CompilerParams(
            dimension_semantics=("parallel", "parallel"),
            vmem_limit_bytes=_VMEM_LIMIT),
    )(xf, wstack, bias)


def conv3x3_s1(x, wstack, bias, cout, relu=True):
    """3x3 / stride-1 / pad-1 conv, im2col fused into the kernel.

    The padded image is flattened to rows of width Wp = W+2; the kernel
    computes a full-width output grid (garbage in the 2 extra columns, sliced
    away afterwards) so every tap is a constant row shift dy*Wp + dx.
    """
    n, h, w, cin = x.shape
    cin_p = wstack.shape[1]
    wp = w + 2
    m_out = h * wp
    mp = _round_up(m_out, 8)
    offsets = (tuple(dy * wp + dx for dy in range(3) for dx in range(3)),)
    rows_needed = mp + 2 * wp + 2
    nat_rows = (h + 3) * wp
    rows = max(nat_rows, rows_needed)
    xp = jnp.pad(x, ((0, 0), (1, 2), (1, 1), (0, cin_p - cin)))
    xf = xp.reshape(n, nat_rows, cin_p)
    if rows > nat_rows:
        xf = jnp.pad(xf, ((0, 0), (0, rows - nat_rows), (0, 0)))
    out = _fused_conv_call(xf, wstack, bias, offsets, mp, relu)
    return out[:, 0, :m_out, :cout].reshape(n, h, wp, cout)[:, :, :w, :]


def conv_transpose4x4_s2(x, wstack, bias, cout, relu=True):
    """ConvTranspose2d(k=4, s=2, p=1) via sub-pixel decomposition: each output
    parity (ry, rx) is a 2x2 stride-1 conv of the 1-padded input; all four run
    inside one Pallas call (fused taps) and are interleaved in XLA."""
    n, h, w, cin = x.shape
    cin_p = wstack.shape[1]
    wp = w + 2
    m_out = h * wp
    mp = _round_up(m_out, 8)
    offsets = tuple(
        tuple((ry + dy) * wp + (rx + dx) for dy in (0, 1) for dx in (0, 1))
        for ry in (0, 1) for rx in (0, 1))
    rows_needed = mp + 2 * wp + 2
    nat_rows = (h + 2) * wp
    rows = max(nat_rows, rows_needed)
    xp = jnp.pad(x, ((0, 0), (1, 1), (1, 1), (0, cin_p - cin)))
    xf = xp.reshape(n, nat_rows, cin_p)
    if rows > nat_rows:
        xf = jnp.pad(xf, ((0, 0), (0, rows - nat_rows), (0, 0)))
    out = _fused_conv_call(xf, wstack, bias, offsets, mp, relu)
    o = out[:, :, :m_out, :cout].reshape(n, 2, 2, h, wp, cout)[:, :, :, :, :w, :]
    # y[n, 2h+ry, 2w+rx, c] = parity(ry, rx)[n, h, w, c]
    return jnp.transpose(o, (0, 3, 1, 4, 2, 5)).reshape(n, 2 * h, 2 * w, cout)


# ---------------------------------------------------------------------------
# Batched tiled GEMM (fused bias + ReLU) for the 5 stride-2 encoder convs
# ---------------------------------------------------------------------------
def _gemm_kernel(a_ref, b_ref, bias_ref, o_ref, *, apply_relu):
    r = jnp.dot(a_ref[...], b_ref[...], preferred_element_type=jnp.float32)
    r = r + bias_ref[...]
    if apply_relu:
        r = jnp.maximum(r, 0.0)
    o_ref[...] = r.astype(o_ref.dtype)


def _gemm_acc_kernel(a_ref, b_ref, bias_ref, o_ref, acc_ref, *, apply_relu):
    @pl.when(pl.program_id(3) == 0)
    def _():
        acc_ref[...] = jnp.zeros_like(acc_ref)

    acc_ref[...] += jnp.dot(a_ref[...], b_ref[...],
                            preferred_element_type=jnp.float32)

    @pl.when(pl.program_id(3) == pl.num_programs(3) - 1)
    def _():
        r = acc_ref[...] + bias_ref[...]
        if apply_relu:
            r = jnp.maximum(r, 0.0)
        o_ref[...] = r.astype(o_ref.dtype)


def _pick_tile(dim_p, unit, cap):
    if dim_p <= cap:
        return dim_p
    t = cap - (cap % unit)
    while t > unit:
        if dim_p % t == 0:
            return t
        t -= unit
    return unit


def _gemm_ws(tm, tk, tn, with_acc):
    ws = 2 * 2 * (tm * tk + tk * tn) + 2 * 2 * tm * tn + 2 * 4 * tn + _SLACK
    if with_acc:
        ws += 4 * tm * tn
    return ws


def _choose_tiles(m, k, n_p):
    mp = _round_up(m, 8)
    tm = _pick_tile(mp, 8, 512)
    tn_cands = [t for t in range(128, n_p + 1, 128) if n_p % t == 0]
    tn_cands.sort(reverse=True)
    w_bytes = k * n_p * 2
    # Single reduction step preferred, but force >= _MIN_GRID_STEPS grid steps
    # (by narrowing TN) whenever the weight DMA is big enough to matter.
    for tn in tn_cands:
        if _gemm_ws(tm, k, tn, False) > _VMEM_BUDGET:
            continue
        steps = (mp // tm) * (n_p // tn)
        if (w_bytes <= _BIG_WEIGHT or steps >= _MIN_GRID_STEPS
                or tn == tn_cands[-1]):
            return mp, tm, k, k, tn
    # Tiled-reduction fallback (not hit at these sizes): shrink TK / TM until
    # the double-buffered working set + accumulator fits the budget.
    tn = tn_cands[-1]
    tk = 512
    while tk > 128 and _gemm_ws(tm, tk, tn, True) > _VMEM_BUDGET:
        tk //= 2
    while tm > 8 and _gemm_ws(tm, tk, tn, True) > _VMEM_BUDGET:
        tm = _pick_tile(mp, 8, tm // 2)
    return mp, tm, _round_up(k, tk), tk, tn


def pallas_gemm_bias(a, b, bias, apply_relu):
    """out[p] = relu?(a[p] @ b[p] + bias).  a: (B,M,K) bf16, b: (B,K,Np) bf16,
    bias: (1,Np) f32.  Returns (B, Mp, Np) bf16."""
    B, M, K = a.shape
    _, Kb, Np = b.shape
    assert K == Kb
    Mp, TM, Kp, TK, TN = _choose_tiles(M, K, Np)
    if Mp != M:
        a = jnp.pad(a, ((0, 0), (0, Mp - M), (0, 0)))
    if Kp != K:
        a = jnp.pad(a, ((0, 0), (0, 0), (0, Kp - K)))
        b = jnp.pad(b, ((0, 0), (0, Kp - K), (0, 0)))

    kt = Kp // TK
    if kt == 1:
        grid = (B, Mp // TM, Np // TN)
        kernel = functools.partial(_gemm_kernel, apply_relu=apply_relu)
        in_specs = [
            pl.BlockSpec((None, TM, TK), lambda p, i, j: (p, i, 0)),
            pl.BlockSpec((None, TK, TN), lambda p, i, j: (p, 0, j)),
            pl.BlockSpec((1, TN), lambda p, i, j: (0, j)),
        ]
        out_specs = pl.BlockSpec((None, TM, TN), lambda p, i, j: (p, i, j))
        scratch = []
        dims = ("parallel", "parallel", "parallel")
    else:
        grid = (B, Mp // TM, Np // TN, kt)
        kernel = functools.partial(_gemm_acc_kernel, apply_relu=apply_relu)
        in_specs = [
            pl.BlockSpec((None, TM, TK), lambda p, i, j, k: (p, i, k)),
            pl.BlockSpec((None, TK, TN), lambda p, i, j, k: (p, k, j)),
            pl.BlockSpec((1, TN), lambda p, i, j, k: (0, j)),
        ]
        out_specs = pl.BlockSpec((None, TM, TN), lambda p, i, j, k: (p, i, j))
        scratch = [pltpu.VMEM((TM, TN), jnp.float32)]
        dims = ("parallel", "parallel", "parallel", "arbitrary")

    return pl.pallas_call(
        kernel,
        out_shape=jax.ShapeDtypeStruct((B, Mp, Np), jnp.bfloat16),
        grid_spec=pltpu.PrefetchScalarGridSpec(
            num_scalar_prefetch=0,
            grid=grid,
            in_specs=in_specs,
            out_specs=out_specs,
            scratch_shapes=scratch),
        compiler_params=pltpu.CompilerParams(
            dimension_semantics=dims,
            vmem_limit_bytes=_VMEM_LIMIT),
    )(a, b, bias)


def conv3x3_s2(x, wm, bias, cout, relu=True):
    """3x3 / stride-2 / pad-1 conv: XLA im2col + Pallas GEMM."""
    n, h, w, cin = x.shape
    k = 3
    kp = wm.shape[1]
    ho = (h + 2 - k) // 2 + 1
    wo = (w + 2 - k) // 2 + 1
    xp = jnp.pad(x, ((0, 0), (1, 1), (1, 1), (0, 0)))
    patches = [
        xp[:, i:i + 2 * (ho - 1) + 1:2, j:j + 2 * (wo - 1) + 1:2, :]
        for i in range(k) for j in range(k)
    ]
    if kp > k * k * cin:
        patches.append(jnp.zeros((n, ho, wo, kp - k * k * cin), x.dtype))
    a = jnp.concatenate(patches, axis=-1).reshape(1, n * ho * wo, kp)
    out = pallas_gemm_bias(a, wm, bias, relu)
    return out[0, :n * ho * wo, :cout].reshape(n, ho, wo, cout)


# ---------------------------------------------------------------------------
# Parameter init (kaiming-normal style, zero bias) + kernel-layout packing
# ---------------------------------------------------------------------------
_CONV_SPECS = [  # (name, cin, cout, stride)
    ("conv1", 33, 64, 1), ("conv1_1", 64, 64, 1),
    ("conv2", 64, 128, 2), ("conv2_1", 128, 128, 1),
    ("conv3", 128, 256, 2), ("conv3_1", 256, 256, 1),
    ("conv4", 256, 512, 2), ("conv4_1", 512, 512, 1),
    ("conv5", 512, 512, 2), ("conv5_1", 512, 512, 1),
    ("conv6", 512, 1024, 2), ("conv6_1", 1024, 1024, 1),
    ("flow6", 1024, 20, 1),
    ("xconv5", 1044, 512, 1), ("flow5", 512, 20, 1),
    ("xconv4", 788, 256, 1), ("flow4", 256, 20, 1),
    ("xconv3", 404, 128, 1), ("flow3", 128, 20, 1),
    ("xconv2", 212, 64, 1), ("flow2", 64, 20, 1),
]
_DECONV_SPECS = [  # (name, cin, cout)
    ("flow6_upsample", 20, 20), ("deconv5", 1024, 512),
    ("flow5_upsample", 20, 20), ("deconv4", 512, 256),
    ("flow4_upsample", 20, 20), ("deconv3", 256, 128),
    ("flow3_upsample", 20, 20), ("deconv2", 128, 64),
]
_COUT = {name: cout for name, _, cout, _ in _CONV_SPECS}
_COUT.update({name: cout for name, _, cout in _DECONV_SPECS})
_STRIDE = {name: s for name, _, _, s in _CONV_SPECS}


def _pad_bias(bias_vec, cout, n_p):
    return jnp.pad(jnp.asarray(bias_vec, jnp.float32).reshape(1, cout),
                   ((0, 0), (0, n_p - cout)))


def _pack_conv_fused(w, bias_vec):
    """(Cout, Cin, 3, 3) torch-layout -> ((9, Cin_p, Np) bf16, (1, Np) f32)."""
    cout, cin = w.shape[0], w.shape[1]
    cin_p = _round_up(cin, 128)
    n_p = _round_up(cout, 128)
    wm = jnp.transpose(w, (2, 3, 1, 0)).reshape(9, cin, cout)
    wm = jnp.pad(wm, ((0, 0), (0, cin_p - cin), (0, n_p - cout)))
    return wm.astype(jnp.bfloat16), _pad_bias(bias_vec, cout, n_p)


def _pack_conv_gemm(w, bias_vec):
    """(Cout, Cin, 3, 3) -> ((1, Kp, Np) bf16 im2col GEMM layout, (1, Np))."""
    cout, cin = w.shape[0], w.shape[1]
    kk = 9 * cin
    kp = _round_up(kk, 128)
    n_p = _round_up(cout, 128)
    wm = jnp.transpose(w, (2, 3, 1, 0)).reshape(kk, cout)
    wm = jnp.pad(wm, ((0, kp - kk), (0, n_p - cout)))
    return wm.astype(jnp.bfloat16)[None], _pad_bias(bias_vec, cout, n_p)


def _pack_deconv_fused(w, bias_vec):
    """(Cin, Cout, 4, 4) ConvTranspose weights -> ((16, Cin_p, Np) bf16, bias).
    Sub-pixel mapping: parity (ry, rx), tap (dy, dx) uses w[:, :, 3-ry-2dy,
    3-rx-2dx]; stacking order matches the kernel's tap offsets."""
    cin, cout = w.shape[0], w.shape[1]
    cin_p = _round_up(cin, 128)
    n_p = _round_up(cout, 128)
    mats = []
    for ry in (0, 1):
        for rx in (0, 1):
            for dy in (0, 1):
                for dx in (0, 1):
                    mats.append(w[:, :, 3 - ry - 2 * dy, 3 - rx - 2 * dx])
    wm = jnp.stack(mats, axis=0)                          # (16, Cin, Cout)
    wm = jnp.pad(wm, ((0, 0), (0, cin_p - cin), (0, n_p - cout)))
    return wm.astype(jnp.bfloat16), _pad_bias(bias_vec, cout, n_p)


def init_params(key):
    params = {}
    keys = jax.random.split(key, len(_CONV_SPECS) + len(_DECONV_SPECS))
    idx = 0
    for name, cin, cout, stride in _CONV_SPECS:
        std = (2.0 / (cout * 9)) ** 0.5      # kaiming_normal_, fan_out, relu
        w = jax.random.normal(keys[idx], (cout, cin, 3, 3), jnp.float32) * std
        idx += 1
        pack = _pack_conv_gemm if stride == 2 else _pack_conv_fused
        params[name] = pack(w, jnp.zeros((cout,), jnp.float32))
    for name, cin, cout in _DECONV_SPECS:
        std = (2.0 / (cout * 16)) ** 0.5     # PyTorch fan_in for (Cin,Cout,4,4)
        w = jax.random.normal(keys[idx], (cin, cout, 4, 4), jnp.float32) * std
        idx += 1
        params[name] = _pack_deconv_fused(w, jnp.zeros((cout,), jnp.float32))
    return params


# ---------------------------------------------------------------------------
# Forward pass (mirrors MotionNet.forward; activations NHWC / bf16)
# ---------------------------------------------------------------------------
def motionnet_forward(params, x):
    x = x.astype(jnp.bfloat16)

    def c(name, h, relu=True):
        wm, b = params[name]
        if _STRIDE[name] == 2:
            return conv3x3_s2(h, wm, b, _COUT[name], relu=relu)
        return conv3x3_s1(h, wm, b, _COUT[name], relu=relu)

    def d(name, h, relu=True):
        wm, b = params[name]
        return conv_transpose4x4_s2(h, wm, b, _COUT[name], relu=relu)

    out = c("conv1", x)
    out = c("conv1_1", out)
    out = c("conv2", out)
    out_conv2_1 = c("conv2_1", out)
    out = c("conv3", out_conv2_1)
    out_conv3_1 = c("conv3_1", out)
    out = c("conv4", out_conv3_1)
    out_conv4_1 = c("conv4_1", out)
    out = c("conv5", out_conv4_1)
    out_conv5_1 = c("conv5_1", out)
    out = c("conv6", out_conv5_1)
    out_conv6_1 = c("conv6_1", out)

    flow6_out = c("flow6", out_conv6_1, relu=False)
    flow6_up = d("flow6_upsample", flow6_out, relu=False)
    out = d("deconv5", out_conv6_1)
    out = c("xconv5", jnp.concatenate([out, out_conv5_1, flow6_up], axis=-1))

    flow5_out = c("flow5", out, relu=False)
    flow5_up = d("flow5_upsample", flow5_out, relu=False)
    out = d("deconv4", out)
    out = c("xconv4", jnp.concatenate([out, out_conv4_1, flow5_up], axis=-1))

    flow4_out = c("flow4", out, relu=False)
    flow4_up = d("flow4_upsample", flow4_out, relu=False)
    out = d("deconv3", out)
    out = c("xconv3", jnp.concatenate([out, out_conv3_1, flow4_up], axis=-1))

    flow3_out = c("flow3", out, relu=False)
    flow3_up = d("flow3_upsample", flow3_out, relu=False)
    out = d("deconv2", out)
    out = c("xconv2", jnp.concatenate([out, out_conv2_1, flow3_up], axis=-1))

    flow2_out = c("flow2", out, relu=False)
    return tuple(f.astype(jnp.float32)
                 for f in (flow2_out, flow3_out, flow4_out, flow5_out, flow6_out))


# ---------------------------------------------------------------------------
# Self-check of the fused kernels against lax references.  Inputs/weights are
# bf16-valued, so MXU products are exact and any geometry/layout bug shows up
# as a gross mismatch (differences are only summation order + final bf16 cast).
# ---------------------------------------------------------------------------
def _self_check():
    key = jax.random.PRNGKey(7)
    k1, k2, k3, k4, k5, k6 = jax.random.split(key, 6)

    # 3x3 / stride-1 / pad-1 conv (odd W, Cin/Cout not multiples of 128, N=2)
    n, h, w, cin, cout = 2, 6, 5, 24, 36
    x = jax.random.normal(k1, (n, h, w, cin), jnp.float32).astype(jnp.bfloat16)
    wt = (jax.random.normal(k2, (cout, cin, 3, 3), jnp.float32) * 0.2
          ).astype(jnp.bfloat16)
    bias = jax.random.normal(k3, (cout,), jnp.float32) * 0.1
    wstack, bp = _pack_conv_fused(wt.astype(jnp.float32), bias)
    got = conv3x3_s1(x, wstack, bp, cout, relu=True).astype(jnp.float32)
    ref = jax.lax.conv_general_dilated(
        x.astype(jnp.float32),
        jnp.transpose(wt.astype(jnp.float32), (2, 3, 1, 0)),
        window_strides=(1, 1), padding=((1, 1), (1, 1)),
        dimension_numbers=("NHWC", "HWIO", "NHWC")) + bias
    ref = jnp.maximum(ref, 0.0)
    assert got.shape == ref.shape
    assert jnp.allclose(got, ref, rtol=2e-2, atol=5e-2), "fused conv mismatch"

    # ConvTranspose2d(k=4, s=2, p=1)
    n, h, w, cin, cout = 2, 3, 4, 16, 28
    x = jax.random.normal(k4, (n, h, w, cin), jnp.float32).astype(jnp.bfloat16)
    wt = (jax.random.normal(k5, (cin, cout, 4, 4), jnp.float32) * 0.2
          ).astype(jnp.bfloat16)
    bias = jax.random.normal(k6, (cout,), jnp.float32) * 0.1
    wstack, bp = _pack_deconv_fused(wt.astype(jnp.float32), bias)
    got = conv_transpose4x4_s2(x, wstack, bp, cout,
                               relu=False).astype(jnp.float32)
    # ConvTranspose(k,s,p) == conv of the x2-dilated input, pad k-1-p, with the
    # spatially-flipped kernel.
    w_hwio = jnp.transpose(wt.astype(jnp.float32)[:, :, ::-1, ::-1],
                           (2, 3, 0, 1))
    ref = jax.lax.conv_general_dilated(
        x.astype(jnp.float32), w_hwio, window_strides=(1, 1),
        padding=((2, 2), (2, 2)), lhs_dilation=(2, 2),
        dimension_numbers=("NHWC", "HWIO", "NHWC")) + bias
    assert got.shape == (n, 2 * h, 2 * w, cout)
    assert jnp.allclose(got, ref, rtol=2e-2, atol=5e-2), "fused deconv mismatch"


if __name__ == "__main__":
    _self_check()

    key = jax.random.PRNGKey(0)
    pkey, xkey = jax.random.split(key)
    params = init_params(pkey)

    # PyTorch module expects NCHW with 33 channels; spatial must be a multiple
    # of 32 (5 stride-2 encoder convs).  Small shape: (1, 33, 32, 32).
    x_nchw = jax.random.normal(xkey, (1, 33, 32, 32), jnp.float32)
    x_nhwc = jnp.transpose(x_nchw, (0, 2, 3, 1))

    fwd = jax.jit(motionnet_forward)
    outs_nhwc = fwd(params, x_nhwc)
    outs = tuple(jnp.transpose(o, (0, 3, 1, 2)) for o in outs_nhwc)
    jax.block_until_ready(outs)

    expected = [(1, 20, 16, 16), (1, 20, 8, 8), (1, 20, 4, 4),
                (1, 20, 2, 2), (1, 20, 1, 1)]
    assert [tuple(o.shape) for o in outs] == expected, \
        [tuple(o.shape) for o in outs]
    assert all(bool(jnp.isfinite(o).all()) for o in outs)
    print("KERNEL_OK")
</pallas_src>

<mosaic_0001>
module attributes {stable_mosaic.version = 11 : i64} {
  func.func @_fused_conv_kernel(%arg0: i32, %arg1: i32, %arg2: memref<1x64x128xbf16, #tpu.memory_space<vmem>>, %arg3: memref<9x128x128xbf16, #tpu.memory_space<vmem>>, %arg4: memref<1x128xf32, #tpu.memory_space<vmem>>, %arg5: memref<1x1x48x128xbf16, #tpu.memory_space<vmem>>, %arg6: memref<48x128xf32, #tpu.memory_space<vmem>>) attributes {dimension_semantics = [#tpu.dimension_semantics<parallel>, #tpu.dimension_semantics<parallel>], iteration_bounds = array<i64: 2, 1>, scalar_prefetch = 0 : i64, scratch_operands = 1 : i64, tpu.core_type = #tpu.core_type<tc>, window_params = [{transform_indices = @transform_0, window_bounds = array<i64: 1, 64, 128>}, {transform_indices = @transform_1, window_bounds = array<i64: 9, 128, 128>}, {transform_indices = @transform_2, window_bounds = array<i64: 1, 128>}, {transform_indices = @transform_3, window_bounds = array<i64: 1, 1, 48, 128>}]} {
    %c0 = arith.constant 0 : index
    %c0_0 = arith.constant 0 : index
    %c0_1 = arith.constant 0 : index
    %0 = vector.load %arg2[%c0, %c0_0, %c0_1] : memref<1x64x128xbf16, #tpu.memory_space<vmem>>, vector<1x48x128xbf16>
    %1 = vector.shape_cast %0 : vector<1x48x128xbf16> to vector<48x128xbf16>
    %c0_2 = arith.constant 0 : index
    %c0_3 = arith.constant 0 : index
    %c0_4 = arith.constant 0 : index
    %2 = vector.load %arg3[%c0_2, %c0_3, %c0_4] : memref<9x128x128xbf16, #tpu.memory_space<vmem>>, vector<1x128x128xbf16>
    %3 = vector.shape_cast %2 : vector<1x128x128xbf16> to vector<128x128xbf16>
    %cst = arith.constant dense<0.000000e+00> : vector<48x128xf32>
    %4 = tpu.matmul %1, %3, %cst {dimension_numbers = #tpu.dot_dimension_numbers<[1], [0], [0], [1], [0, 0, 1, 1], [], []>} : vector<48x128xbf16>, vector<128x128xbf16>, vector<48x128xf32> -> vector<48x128xf32>
    %c0_5 = arith.constant 0 : index
    %c0_6 = arith.constant 0 : index
    %5 = vector.load %arg6[%c0_5, %c0_6] : memref<48x128xf32, #tpu.memory_space<vmem>>, vector<48x128xf32>
    tpu.vector_store %arg6[%c0_5, %c0_6], %4 {strides = array<i32>} : memref<48x128xf32, #tpu.memory_space<vmem>>, vector<48x128xf32>,
    %c0_7 = arith.constant 0 : index
    %c1 = arith.constant 1 : index
    %c0_8 = arith.constant 0 : index
    %6 = vector.load %arg2[%c0_7, %c1, %c0_8] : memref<1x64x128xbf16, #tpu.memory_space<vmem>>, vector<1x48x128xbf16>
    %7 = vector.shape_cast %6 : vector<1x48x128xbf16> to vector<48x128xbf16>
    %c1_9 = arith.constant 1 : index
    %c0_10 = arith.constant 0 : index
    %c0_11 = arith.constant 0 : index
    %8 = vector.load %arg3[%c1_9, %c0_10, %c0_11] : memref<9x128x128xbf16, #tpu.memory_space<vmem>>, vector<1x128x128xbf16>
    %9 = vector.shape_cast %8 : vector<1x128x128xbf16> to vector<128x128xbf16>
    %cst_12 = arith.constant dense<0.000000e+00> : vector<48x128xf32>
    %10 = tpu.matmul %7, %9, %cst_12 {dimension_numbers = #tpu.dot_dimension_numbers<[1], [0], [0], [1], [0, 0, 1, 1], [], []>} : vector<48x128xbf16>, vector<128x128xbf16>, vector<48x128xf32> -> vector<48x128xf32>
    %c0_13 = arith.constant 0 : index
    %c0_14 = arith.constant 0 : index
    %11 = vector.load %arg6[%c0_13, %c0_14] : memref<48x128xf32, #tpu.memory_space<vmem>>, vector<48x128xf32>
    %12 = arith.addf %11, %10 : vector<48x128xf32>
    %c0_15 = arith.constant 0 : index
    %c0_16 = arith.constant 0 : index
    %13 = vector.load %arg6[%c0_15, %c0_16] : memref<48x128xf32, #tpu.memory_space<vmem>>, vector<48x128xf32>
    tpu.vector_store %arg6[%c0_15, %c0_16], %12 {strides = array<i32>} : memref<48x128xf32, #tpu.memory_space<vmem>>, vector<48x128xf32>,
    %c0_17 = arith.constant 0 : index
    %c2 = arith.constant 2 : index
    %c0_18 = arith.constant 0 : index
    %14 = vector.load %arg2[%c0_17, %c2, %c0_18] : memref<1x64x128xbf16, #tpu.memory_space<vmem>>, vector<1x48x128xbf16>
    %15 = vector.shape_cast %14 : vector<1x48x128xbf16> to vector<48x128xbf16>
    %c2_19 = arith.constant 2 : index
    %c0_20 = arith.constant 0 : index
    %c0_21 = arith.constant 0 : index
    %16 = vector.load %arg3[%c2_19, %c0_20, %c0_21] : memref<9x128x128xbf16, #tpu.memory_space<vmem>>, vector<1x128x128xbf16>
    %17 = vector.shape_cast %16 : vector<1x128x128xbf16> to vector<128x128xbf16>
    %cst_22 = arith.constant dense<0.000000e+00> : vector<48x128xf32>
    %18 = tpu.matmul %15, %17, %cst_22 {dimension_numbers = #tpu.dot_dimension_numbers<[1], [0], [0], [1], [0, 0, 1, 1], [], []>} : vector<48x128xbf16>, vector<128x128xbf16>, vector<48x128xf32> -> vector<48x128xf32>
    %c0_23 = arith.constant 0 : index
    %c0_24 = arith.constant 0 : index
    %19 = vector.load %arg6[%c0_23, %c0_24] : memref<48x128xf32, #tpu.memory_space<vmem>>, vector<48x128xf32>
    %20 = arith.addf %19, %18 : vector<48x128xf32>
    %c0_25 = arith.constant 0 : index
    %c0_26 = arith.constant 0 : index
    %21 = vector.load %arg6[%c0_25, %c0_26] : memref<48x128xf32, #tpu.memory_space<vmem>>, vector<48x128xf32>
    tpu.vector_store %arg6[%c0_25, %c0_26], %20 {strides = array<i32>} : memref<48x128xf32, #tpu.memory_space<vmem>>, vector<48x128xf32>,
    %c0_27 = arith.constant 0 : index
    %c7 = arith.constant 7 : index
    %c0_28 = arith.constant 0 : index
    %22 = vector.load %arg2[%c0_27, %c7, %c0_28] : memref<1x64x128xbf16, #tpu.memory_space<vmem>>, vector<1x48x128xbf16>
    %23 = vector.shape_cast %22 : vector<1x48x128xbf16> to vector<48x128xbf16>
    %c3 = arith.constant 3 : index
    %c0_29 = arith.constant 0 : index
    %c0_30 = arith.constant 0 : index
    %24 = vector.load %arg3[%c3, %c0_29, %c0_30] : memref<9x128x128xbf16, #tpu.memory_space<vmem>>, vector<1x128x128xbf16>
    %25 = vector.shape_cast %24 : vector<1x128x128xbf16> to vector<128x128xbf16>
    %cst_31 = arith.constant dense<0.000000e+00> : vector<48x128xf32>
    %26 = tpu.matmul %23, %25, %cst_31 {dimension_numbers = #tpu.dot_dimension_numbers<[1], [0], [0], [1], [0, 0, 1, 1], [], []>} : vector<48x128xbf16>, vector<128x128xbf16>, vector<48x128xf32> -> vector<48x128xf32>
    %c0_32 = arith.constant 0 : index
    %c0_33 = arith.constant 0 : index
    %27 = vector.load %arg6[%c0_32, %c0_33] : memref<48x128xf32, #tpu.memory_space<vmem>>, vector<48x128xf32>
    %28 = arith.addf %27, %26 : vector<48x128xf32>
    %c0_34 = arith.constant 0 : index
    %c0_35 = arith.constant 0 : index
    %29 = vector.load %arg6[%c0_34, %c0_35] : memref<48x128xf32, #tpu.memory_space<vmem>>, vector<48x128xf32>
    tpu.vector_store %arg6[%c0_34, %c0_35], %28 {strides = array<i32>} : memref<48x128xf32, #tpu.memory_space<vmem>>, vector<48x128xf32>,
    %c0_36 = arith.constant 0 : index
    %c8 = arith.constant 8 : index
    %c0_37 = arith.constant 0 : index
    %30 = vector.load %arg2[%c0_36, %c8, %c0_37] : memref<1x64x128xbf16, #tpu.memory_space<vmem>>, vector<1x48x128xbf16>
    %31 = vector.shape_cast %30 : vector<1x48x128xbf16> to vector<48x128xbf16>
    %c4 = arith.constant 4 : index
    %c0_38 = arith.constant 0 : index
    %c0_39 = arith.constant 0 : index
    %32 = vector.load %arg3[%c4, %c0_38, %c0_39] : memref<9x128x128xbf16, #tpu.memory_space<vmem>>, vector<1x128x128xbf16>
    %33 = vector.shape_cast %32 : vector<1x128x128xbf16> to vector<128x128xbf16>
    %cst_40 = arith.constant dense<0.000000e+00> : vector<48x128xf32>
    %34 = tpu.matmul %31, %33, %cst_40 {dimension_numbers = #tpu.dot_dimension_numbers<[1], [0], [0], [1], [0, 0, 1, 1], [], []>} : vector<48x128xbf16>, vector<128x128xbf16>, vector<48x128xf32> -> vector<48x128xf32>
    %c0_41 = arith.constant 0 : index
    %c0_42 = arith.constant 0 : index
    %35 = vector.load %arg6[%c0_41, %c0_42] : memref<48x128xf32, #tpu.memory_space<vmem>>, vector<48x128xf32>
    %36 = arith.addf %35, %34 : vector<48x128xf32>
    %c0_43 = arith.constant 0 : index
    %c0_44 = arith.constant 0 : index
    %37 = vector.load %arg6[%c0_43, %c0_44] : memref<48x128xf32, #tpu.memory_space<vmem>>, vector<48x128xf32>
    tpu.vector_store %arg6[%c0_43, %c0_44], %36 {strides = array<i32>} : memref<48x128xf32, #tpu.memory_space<vmem>>, vector<48x128xf32>,
    %c0_45 = arith.constant 0 : index
    %c9 = arith.constant 9 : index
    %c0_46 = arith.constant 0 : index
    %38 = vector.load %arg2[%c0_45, %c9, %c0_46] : memref<1x64x128xbf16, #tpu.memory_space<vmem>>, vector<1x48x128xbf16>
    %39 = vector.shape_cast %38 : vector<1x48x128xbf16> to vector<48x128xbf16>
    %c5 = arith.constant 5 : index
    %c0_47 = arith.constant 0 : index
    %c0_48 = arith.constant 0 : index
    %40 = vector.load %arg3[%c5, %c0_47, %c0_48] : memref<9x128x128xbf16, #tpu.memory_space<vmem>>, vector<1x128x128xbf16>
    %41 = vector.shape_cast %40 : vector<1x128x128xbf16> to vector<128x128xbf16>
    %cst_49 = arith.constant dense<0.000000e+00> : vector<48x128xf32>
    %42 = tpu.matmul %39, %41, %cst_49 {dimension_numbers = #tpu.dot_dimension_numbers<[1], [0], [0], [1], [0, 0, 1, 1], [], []>} : vector<48x128xbf16>, vector<128x128xbf16>, vector<48x128xf32> -> vector<48x128xf32>
    %c0_50 = arith.constant 0 : index
    %c0_51 = arith.constant 0 : index
    %43 = vector.load %arg6[%c0_50, %c0_51] : memref<48x128xf32, #tpu.memory_space<vmem>>, vector<48x128xf32>
    %44 = arith.addf %43, %42 : vector<48x128xf32>
    %c0_52 = arith.constant 0 : index
    %c0_53 = arith.constant 0 : index
    %45 = vector.load %arg6[%c0_52, %c0_53] : memref<48x128xf32, #tpu.memory_space<vmem>>, vector<48x128xf32>
    tpu.vector_store %arg6[%c0_52, %c0_53], %44 {strides = array<i32>} : memref<48x128xf32, #tpu.memory_space<vmem>>, vector<48x128xf32>,
    %c0_54 = arith.constant 0 : index
    %c14 = arith.constant 14 : index
    %c0_55 = arith.constant 0 : index
    %46 = vector.load %arg2[%c0_54, %c14, %c0_55] : memref<1x64x128xbf16, #tpu.memory_space<vmem>>, vector<1x48x128xbf16>
    %47 = vector.shape_cast %46 : vector<1x48x128xbf16> to vector<48x128xbf16>
    %c6 = arith.constant 6 : index
    %c0_56 = arith.constant 0 : index
    %c0_57 = arith.constant 0 : index
    %48 = vector.load %arg3[%c6, %c0_56, %c0_57] : memref<9x128x128xbf16, #tpu.memory_space<vmem>>, vector<1x128x128xbf16>
    %49 = vector.shape_cast %48 : vector<1x128x128xbf16> to vector<128x128xbf16>
    %cst_58 = arith.constant dense<0.000000e+00> : vector<48x128xf32>
    %50 = tpu.matmul %47, %49, %cst_58 {dimension_numbers = #tpu.dot_dimension_numbers<[1], [0], [0], [1], [0, 0, 1, 1], [], []>} : vector<48x128xbf16>, vector<128x128xbf16>, vector<48x128xf32> -> vector<48x128xf32>
    %c0_59 = arith.constant 0 : index
    %c0_60 = arith.constant 0 : index
    %51 = vector.load %arg6[%c0_59, %c0_60] : memref<48x128xf32, #tpu.memory_space<vmem>>, vector<48x128xf32>
    %52 = arith.addf %51, %50 : vector<48x128xf32>
    %c0_61 = arith.constant 0 : index
    %c0_62 = arith.constant 0 : index
    %53 = vector.load %arg6[%c0_61, %c0_62] : memref<48x128xf32, #tpu.memory_space<vmem>>, vector<48x128xf32>
    tpu.vector_store %arg6[%c0_61, %c0_62], %52 {strides = array<i32>} : memref<48x128xf32, #tpu.memory_space<vmem>>, vector<48x128xf32>,
    %c0_63 = arith.constant 0 : index
    %c15 = arith.constant 15 : index
    %c0_64 = arith.constant 0 : index
    %54 = vector.load %arg2[%c0_63, %c15, %c0_64] : memref<1x64x128xbf16, #tpu.memory_space<vmem>>, vector<1x48x128xbf16>
    %55 = vector.shape_cast %54 : vector<1x48x128xbf16> to vector<48x128xbf16>
    %c7_65 = arith.constant 7 : index
    %c0_66 = arith.constant 0 : index
    %c0_67 = arith.constant 0 : index
    %56 = vector.load %arg3[%c7_65, %c0_66, %c0_67] : memref<9x128x128xbf16, #tpu.memory_space<vmem>>, vector<1x128x128xbf16>
    %57 = vector.shape_cast %56 : vector<1x128x128xbf16> to vector<128x128xbf16>
    %cst_68 = arith.constant dense<0.000000e+00> : vector<48x128xf32>
    %58 = tpu.matmul %55, %57, %cst_68 {dimension_numbers = #tpu.dot_dimension_numbers<[1], [0], [0], [1], [0, 0, 1, 1], [], []>} : vector<48x128xbf16>, vector<128x128xbf16>, vector<48x128xf32> -> vector<48x128xf32>
    %c0_69 = arith.constant 0 : index
    %c0_70 = arith.constant 0 : index
    %59 = vector.load %arg6[%c0_69, %c0_70] : memref<48x128xf32, #tpu.memory_space<vmem>>, vector<48x128xf32>
    %60 = arith.addf %59, %58 : vector<48x128xf32>
    %c0_71 = arith.constant 0 : index
    %c0_72 = arith.constant 0 : index
    %61 = vector.load %arg6[%c0_71, %c0_72] : memref<48x128xf32, #tpu.memory_space<vmem>>, vector<48x128xf32>
    tpu.vector_store %arg6[%c0_71, %c0_72], %60 {strides = array<i32>} : memref<48x128xf32, #tpu.memory_space<vmem>>, vector<48x128xf32>,
    %c0_73 = arith.constant 0 : index
    %c16 = arith.constant 16 : index
    %c0_74 = arith.constant 0 : index
    %62 = vector.load %arg2[%c0_73, %c16, %c0_74] : memref<1x64x128xbf16, #tpu.memory_space<vmem>>, vector<1x48x128xbf16>
    %63 = vector.shape_cast %62 : vector<1x48x128xbf16> to vector<48x128xbf16>
    %c8_75 = arith.constant 8 : index
    %c0_76 = arith.constant 0 : index
    %c0_77 = arith.constant 0 : index
    %64 = vector.load %arg3[%c8_75, %c0_76, %c0_77] : memref<9x128x128xbf16, #tpu.memory_space<vmem>>, vector<1x128x128xbf16>
    %65 = vector.shape_cast %64 : vector<1x128x128xbf16> to vector<128x128xbf16>
    %cst_78 = arith.constant dense<0.000000e+00> : vector<48x128xf32>
    %66 = tpu.matmul %63, %65, %cst_78 {dimension_numbers = #tpu.dot_dimension_numbers<[1], [0], [0], [1], [0, 0, 1, 1], [], []>} : vector<48x128xbf16>, vector<128x128xbf16>, vector<48x128xf32> -> vector<48x128xf32>
    %c0_79 = arith.constant 0 : index
    %c0_80 = arith.constant 0 : index
    %67 = vector.load %arg6[%c0_79, %c0_80] : memref<48x128xf32, #tpu.memory_space<vmem>>, vector<48x128xf32>
    %68 = arith.addf %67, %66 : vector<48x128xf32>
    %c0_81 = arith.constant 0 : index
    %c0_82 = arith.constant 0 : index
    %69 = vector.load %arg6[%c0_81, %c0_82] : memref<48x128xf32, #tpu.memory_space<vmem>>, vector<48x128xf32>
    tpu.vector_store %arg6[%c0_81, %c0_82], %68 {strides = array<i32>} : memref<48x128xf32, #tpu.memory_space<vmem>>, vector<48x128xf32>,
    %c0_83 = arith.constant 0 : index
    %c0_84 = arith.constant 0 : index
    %70 = vector.load %arg6[%c0_83, %c0_84] : memref<48x128xf32, #tpu.memory_space<vmem>>, vector<48x128xf32>
    %c0_85 = arith.constant 0 : index
    %c0_86 = arith.constant 0 : index
    %71 = vector.load %arg4[%c0_85, %c0_86] : memref<1x128xf32, #tpu.memory_space<vmem>>, vector<1x128xf32>
    %72 = vector.broadcast %71 : vector<1x128xf32> to vector<48x128xf32>
    %73 = arith.addf %70, %72 : vector<48x128xf32>
    %cst_87 = arith.constant 0.000000e+00 : f32
    %74 = vector.broadcast %cst_87 : f32 to vector<48x128xf32>
    %75 = arith.maximumf %73, %74 : vector<48x128xf32>
    %76 = arith.truncf %75 : vector<48x128xf32> to vector<48x128xbf16>
    %c0_88 = arith.constant 0 : index
    %c0_89 = arith.constant 0 : index
    %c0_90 = arith.constant 0 : index
    %c0_91 = arith.constant 0 : index
    %77 = vector.load %arg5[%c0_88, %c0_89, %c0_90, %c0_91] : memref<1x1x48x128xbf16, #tpu.memory_space<vmem>>, vector<1x1x48x128xbf16>
    %78 = vector.shape_cast %77 : vector<1x1x48x128xbf16> to vector<48x128xbf16>
    %79 = vector.shape_cast %76 : vector<48x128xbf16> to vector<1x1x48x128xbf16>
    tpu.vector_store %arg5[%c0_88, %c0_89, %c0_90, %c0_91], %79 {strides = array<i32>} : memref<1x1x48x128xbf16, #tpu.memory_space<vmem>>, vector<1x1x48x128xbf16>,
    return
  }
  func.func @transform_0(%arg0: i32, %arg1: i32) -> (i32, i32, i32) {
    %c0_i32 = arith.constant 0 : i32
    %c0_i32_0 = arith.constant 0 : i32
    %c0_i32_1 = arith.constant 0 : i32
    return %arg0, %c0_i32, %c0_i32_0 : i32, i32, i32
  }
  func.func @transform_1(%arg0: i32, %arg1: i32) -> (i32, i32, i32) {
    %c0_i32 = arith.constant 0 : i32
    %c0_i32_0 = arith.constant 0 : i32
    %c0_i32_1 = arith.constant 0 : i32
    return %c0_i32, %c0_i32_0, %arg1 : i32, i32, i32
  }
  func.func @transform_2(%arg0: i32, %arg1: i32) -> (i32, i32) {
    %c0_i32 = arith.constant 0 : i32
    %c0_i32_0 = arith.constant 0 : i32
    return %c0_i32, %arg1 : i32, i32
  }
  func.func @transform_3(%arg0: i32, %arg1: i32) -> (i32, i32, i32, i32) {
    %c0_i32 = arith.constant 0 : i32
    %c0_i32_0 = arith.constant 0 : i32
    %c0_i32_1 = arith.constant 0 : i32
    return %arg0, %c0_i32, %c0_i32_0, %arg1 : i32, i32, i32, i32
  }
}

</mosaic_0001>

<llo_original>
// kernel: tpu_custom_call.1
$region0: #{tpu_custom_call.1}
  #allocation0 [shape = 'u32[]', space=smem, size = 0x4, offset = 0x4, fixed_abs, tag = 'smem constant byte address 0x4 - core index']
  #allocation1 [shape = 'u32[144,128]{1,0:T(1,128)}', space=vmem, size = 0x12000, scoped, tag = 'internal scratch']
  #allocation2 [shape = 'f32[48,128]{1,0:T(8,128)}', space=vmem, size = 0x6000, scoped, tag = 'scratch operand']
  %s0 = inlined_call_operand.hbm [shape: bf16[2,64,128], index: 0, kind: input, shape index: {}]
  %s1 = inlined_call_operand.hbm [shape: bf16[9,128,128], index: 1, kind: input, shape index: {}]
  %s2 = inlined_call_operand.vmem [shape: f32[1,128], index: 2, kind: input, shape index: {}]
  %s3 = inlined_call_operand.hbm [shape: bf16[2,1,48,128], index: 3, kind: output, shape index: {}]
  %s4 = sld [smem:[#allocation0]]
  $region53: #{tpu_custom_call.1} parent=0
    _
  %s6 = ssub.s32 1, %s4
  %s7 = scalar_select 0, %s6, %s4
  $region1: #{tpu_custom_call.1} parent=0
    #allocation3 [shape = 'u8[32768]{0}', space=vmem, size = 0x8000, scoped, tag = 'input window, operand 0']
    #allocation4 [shape = 's32[2]{0}', space=sflag, size = 0x8, scoped, tag = 'scoped memory for tpu_custom_call.1']
    #allocation5 [shape = 's32[2]{0}', space=sflag, size = 0x8, scoped, tag = 'scoped memory for tpu_custom_call.1']
    #allocation6 [shape = 'u8[294912]{0}', space=vmem, size = 0x48000, scoped, tag = 'input window, operand 1, single buffered']
    #allocation7 [shape = 's32[1]{0}', space=sflag, size = 0x4, scoped, tag = 'scoped memory for tpu_custom_call.1']
    #allocation8 [shape = 'u8[24576]{0}', space=vmem, size = 0x6000, scoped, tag = 'output window, operand 0']
    %8 = vsyncpa [#allocation4], 0
    %s9 = scalar_lea.sflag [#allocation4], 1
    %10 = vsyncpa %s9, 0
    %11 = vsyncpa [#allocation7], 0
    %12 = vsyncpa [#allocation5], 0
    %s13 = scalar_lea.sflag [#allocation5], 1
    %14 = vsyncpa %s13, 0
    loop: start=0, step=1, limit=4
    $region2: #{tpu_custom_call.1} parent=1 // loop_pre_header
      _
    $region3: #{tpu_custom_call.1} parent=1 // loop_header
      %s16 = sphi 0, %s20
      %p17 = scmp.ge.s32.totalorder %s16, 4
      %s23 = sphi 0, %s35
      %s24 = sphi 0, %s31
      %s25 = sphi 0, %s23
      %s26 = sphi 0, %s24
      %s27 = sphi 0, %s25
      %s28 = sphi 0, %s26
      %s38 = sphi 0, %s40
      %s41 = sphi 0, %s38
      %s42 = sphi 0, %s41
      %s58 = sphi 0, %s42
      %s64 = sphi 0, %s66
      %s67 = sphi 0, %s64
      %s68 = sphi 0, %s67
      %s84 = sphi 0, %s68
      %s90 = sphi 0, %s92
      %s93 = sphi 0, %s90
      %s94 = sphi 0, %s93
      %s110 = sphi 0, %s94
      %s118 = sphi 0, %s120
      %s121 = sphi 0, %s118
      %s122 = sphi 0, %s121
      %s138 = sphi 0, %s122
    $region4: #{tpu_custom_call.1} parent=1 // loop_header_branch
      %19 = sbr.rel (%p17) target = $region8
    $region5: #{tpu_custom_call.1} parent=1 // loop_body
      %s21 = ssub.s32 %s16, 1
      %s22 = ssub.s32 %s16, 2
      %s29 = sadd.s32 1, %s24
      %p30 = scmp.ge.s32.totalorder %s29, 1
      %s31 = scalar_select %p30, 0, %s29
      %s32 = sadd.s32 1, %s23
      %s33 = scalar_select %p30, %s32, %s23
      %p34 = scmp.ge.s32.totalorder %s33, 2
      %s35 = scalar_select %p34, 0, %s33
      %s36 = ssub.s32 %s23, %s35
      %p37 = scmp.eq.s32.totalorder %s36, 0
      %s39 = sadd.s32 %s38, 1
      %s40 = scalar_select %p37, %s38, %s39
      %p43 = pneg %p37
      %p44 = scmp.eq.s32.totalorder %s16, 1
      %p45 = por %p43, %p44
      %p46 = scmp.ne.s32.totalorder %s38, %s41
      %p47 = scmp.eq.s32.totalorder %s16, 0
      %p48 = por %p46, %p47
      %p49 = scmp.ne.s32.totalorder %s38, %s41
      %p50 = scmp.eq.s32.totalorder %s21, 1
      %p51 = por %p49, %p50
      %p52 = scmp.ne.s32.totalorder %s41, %s42
      %p53 = scmp.eq.s32.totalorder %s21, 0
      %p54 = por %p52, %p53
      %p55 = scmp.ne.s32.totalorder %s41, %s42
      %p56 = scmp.eq.s32.totalorder %s22, 1
      %p57 = por %p55, %p56
      %p59 = scmp.ne.s32.totalorder %s42, %s58
      %p60 = scmp.eq.s32.totalorder %s22, 0
      %p61 = por %p59, %p60
      %s62 = ssub.s32 %s24, %s31
      %p63 = scmp.eq.s32.totalorder %s62, 0
      %s65 = sadd.s32 %s64, 1
      %s66 = scalar_select %p63, %s64, %s65
      %p69 = pneg %p63
      %p70 = scmp.eq.s32.totalorder %s16, 1
      %p71 = por %p69, %p70
      %p72 = scmp.ne.s32.totalorder %s64, %s67
      %p73 = scmp.eq.s32.totalorder %s16, 0
      %p74 = por %p72, %p73
      %p75 = scmp.ne.s32.totalorder %s64, %s67
      %p76 = scmp.eq.s32.totalorder %s21, 1
      %p77 = por %p75, %p76
      %p78 = scmp.ne.s32.totalorder %s67, %s68
      %p79 = scmp.eq.s32.totalorder %s21, 0
      %p80 = por %p78, %p79
      %p81 = scmp.ne.s32.totalorder %s67, %s68
      %p82 = scmp.eq.s32.totalorder %s22, 1
      %p83 = por %p81, %p82
      %p85 = scmp.ne.s32.totalorder %s68, %s84
      %p86 = scmp.eq.s32.totalorder %s22, 0
      %p87 = por %p85, %p86
      %s88 = ssub.s32 %s24, %s31
      %p89 = scmp.eq.s32.totalorder %s88, 0
      %s91 = sadd.s32 %s90, 1
      %s92 = scalar_select %p89, %s90, %s91
      %p95 = pneg %p89
      %p96 = scmp.eq.s32.totalorder %s16, 1
      %p97 = por %p95, %p96
      %p98 = scmp.ne.s32.totalorder %s90, %s93
      %p99 = scmp.eq.s32.totalorder %s16, 0
      %p100 = por %p98, %p99
      %p101 = scmp.ne.s32.totalorder %s90, %s93
      %p102 = scmp.eq.s32.totalorder %s21, 1
      %p103 = por %p101, %p102
      %p104 = scmp.ne.s32.totalorder %s93, %s94
      %p105 = scmp.eq.s32.totalorder %s21, 0
      %p106 = por %p104, %p105
      %p107 = scmp.ne.s32.totalorder %s93, %s94
      %p108 = scmp.eq.s32.totalorder %s22, 1
      %p109 = por %p107, %p108
      %p111 = scmp.ne.s32.totalorder %s94, %s110
      %p112 = scmp.eq.s32.totalorder %s22, 0
      %p113 = por %p111, %p112
      %s114 = ssub.s32 %s23, %s35
      %s115 = ssub.s32 %s24, %s31
      %s116 = sor.u32 %s114, %s115
      %p117 = scmp.eq.s32.totalorder %s116, 0
      %s119 = sadd.s32 %s118, 1
      %s120 = scalar_select %p117, %s118, %s119
      %p123 = pneg %p117
      %p124 = scmp.eq.s32.totalorder %s16, 1
      %p125 = por %p123, %p124
      %p126 = scmp.ne.s32.totalorder %s118, %s121
      %p127 = scmp.eq.s32.totalorder %s16, 0
      %p128 = por %p126, %p127
      %p129 = scmp.ne.s32.totalorder %s118, %s121
      %p130 = scmp.eq.s32.totalorder %s21, 1
      %p131 = por %p129, %p130
      %p132 = scmp.ne.s32.totalorder %s121, %s122
      %p133 = scmp.eq.s32.totalorder %s21, 0
      %p134 = por %p132, %p133
      %p135 = scmp.ne.s32.totalorder %s121, %s122
      %p136 = scmp.eq.s32.totalorder %s22, 1
      %p137 = por %p135, %p136
      %p139 = scmp.ne.s32.totalorder %s122, %s138
      %p140 = scmp.eq.s32.totalorder %s22, 0
      %p141 = por %p139, %p140
      %p142 = scmp.le.s32.totalorder 1, %s16
      %p143 = scmp.lt.s32.totalorder %s16, 3
      %p144 = pnand %p142, %p143
      %p145 = pneg %p144
      // Predicated region
      $region9: #{tpu_custom_call.1} parent=5 // pred_check
        _
      $region10: #{tpu_custom_call.1} parent=5 // pred_check_branch
        %147 = sbr.rel (%p144) target = $region12
      $region11: #{tpu_custom_call.1} parent=5 // pred_region
        %s148 = ssub.s32 %s16, 1
        // Predicated region
        $region13: #{tpu_custom_call.1} parent=11 // pred_check
          %p149 = pneg %p80
        $region14: #{tpu_custom_call.1} parent=11 // pred_check_branch
          %151 = sbr.rel (%p149) target = $region16
        $region15: #{tpu_custom_call.1} parent=11 // pred_region
          %s153 = ssub.s32 9216, 9216
          %154 = vsyncadd [#allocation7], %s153
          %s155 = smul.addr %s26, 64
          %s156 = scalar_lea.hbm %s1, %s155
          %s157 = sshll.u32 [#allocation6], 4
          %s158 = int_to_ptr.vmem [resolvable:$true] %s157
          %163 = dma.hbm_to_vmem [thread:$0]  %s156, 9216, %s158, [#allocation7], 64, 64, 4
        $region16: #{tpu_custom_call.1} parent=11 // pred_fallthru
          _
        // Predicated region
        $region17: #{tpu_custom_call.1} parent=11 // pred_check
          %p164 = pneg %p106
        $region18: #{tpu_custom_call.1} parent=11 // pred_check_branch
          %166 = sbr.rel (%p164) target = $region20
        $region19: #{tpu_custom_call.1} parent=11 // pred_region
          %p167 = scmp.lt.s32.totalorder %s26, 0
          %s168 = scalar_select %p167, %s26, 0
          %s169 = scalar_lea.vmem %s2, %s168
        $region20: #{tpu_custom_call.1} parent=11 // pred_fallthru
          _
      $region12: #{tpu_custom_call.1} parent=5 // pred_fallthru
        _
      %p170 = scmp.lt.s32.totalorder %s16, 2
      // Predicated region
      $region21: #{tpu_custom_call.1} parent=5 // pred_check
        %p171 = pneg %p170
      $region22: #{tpu_custom_call.1} parent=5 // pred_check_branch
        %173 = sbr.rel (%p171) target = $region24
      $region23: #{tpu_custom_call.1} parent=5 // pred_region
        // Predicated region
        $region25: #{tpu_custom_call.1} parent=23 // pred_check
          %p174 = pneg %p48
        $region26: #{tpu_custom_call.1} parent=23 // pred_check_branch
          %176 = sbr.rel (%p174) target = $region28
        $region27: #{tpu_custom_call.1} parent=23 // pred_region
          %s177 = sand.u32 %s38, 1
          %s178 = scalar_lea.sflag [#allocation4], %s177
          %s179 = sand.u32 %s38, 1
          %s180 = smul.addr %s179, 32
          %s181 = scalar_lea.vmem [#allocation3], %s180
          %s183 = ssub.s32 512, 512
          %184 = vsyncadd %s178, %s183
          %s185 = smul.addr %s23, 8
          %s186 = smul.addr %s185, 64
          %s187 = scalar_lea.hbm %s0, %s186
          %s188 = sshll.u32 %s181, 4
          %s189 = int_to_ptr.vmem [resolvable:$true] %s188
          %194 = dma.hbm_to_vmem [thread:$0]  %s187, 512, %s189, %s178, 64, 64, 4
        $region28: #{tpu_custom_call.1} parent=23 // pred_fallthru
          _
      $region24: #{tpu_custom_call.1} parent=5 // pred_fallthru
        _
      %p195 = scmp.le.s32.totalorder 1, %s16
      %p196 = scmp.lt.s32.totalorder %s16, 3
      %p197 = pnand %p195, %p196
      %p198 = pneg %p197
      // Predicated region
      $region29: #{tpu_custom_call.1} parent=5 // pred_check
        _
      $region30: #{tpu_custom_call.1} parent=5 // pred_check_branch
        %200 = sbr.rel (%p197) target = $region32
      $region31: #{tpu_custom_call.1} parent=5 // pred_region
        %s201 = ssub.s32 %s16, 1
        %s202 = sand.u32 %s41, 1
        %s203 = scalar_lea.sflag [#allocation4], %s202
        %s204 = sand.u32 %s41, 1
        %s205 = smul.addr %s204, 32
        %s206 = scalar_lea.vmem [#allocation3], %s205
        // Predicated region
        $region33: #{tpu_custom_call.1} parent=31 // pred_check
          %p207 = pneg %p54
        $region34: #{tpu_custom_call.1} parent=31 // pred_check_branch
          %209 = sbr.rel (%p207) target = $region36
        $region35: #{tpu_custom_call.1} parent=31 // pred_region
          %210 = dma.done %s203, 512
        $region36: #{tpu_custom_call.1} parent=31 // pred_fallthru
          _
        // Predicated region
        $region37: #{tpu_custom_call.1} parent=31 // pred_check
          %p211 = pneg %p80
        $region38: #{tpu_custom_call.1} parent=31 // pred_check_branch
          %213 = sbr.rel (%p211) target = $region40
        $region39: #{tpu_custom_call.1} parent=31 // pred_region
          %214 = dma.done [#allocation7], 9216
        $region40: #{tpu_custom_call.1} parent=31 // pred_fallthru
          _
        %s215 = sand.u32 %s41, 1
        %s216 = scalar_lea.sflag [#allocation4], %s215
        %s217 = sand.u32 %s41, 1
        %s218 = smul.addr %s217, 32
        %s219 = scalar_lea.vmem [#allocation3], %s218
        %p220 = pneg %p54
        %p221 = pneg %p51
        %p222 = pneg %p80
        %p223 = pneg %p77
        %p224 = scmp.lt.s32.totalorder %s26, 0
        %s225 = scalar_select %p224, %s26, 0
        %s226 = scalar_lea.vmem %s2, %s225
        %p227 = pneg %p106
        %p228 = pneg %p103
        %p229 = pneg %p134
        %p230 = pneg %p131
        %s231 = sand.u32 %s121, 1
        %s232 = scalar_lea.sflag [#allocation5], %s231
        %s233 = sand.u32 %s121, 1
        %s234 = smul.addr %s233, 24
        %s235 = scalar_lea.vmem [#allocation8], %s234
        %p236 = scmp.lt.s32.totalorder %s26, 0
        %s237 = scalar_select %p236, %s26, 0
        %s238 = scalar_lea.vmem %s2, %s237
        %v240 = vld [vmem:[%s206] sm:$0xf]
        %v241 = vld [vmem:[%s206 + $0x4] sm:$0xf]
        %v242 = vld [vmem:[%s206 + $0x8] sm:$0xf]
        %v243 = vld [vmem:[%s206 + $0xc] sm:$0xf]
        %v244 = vld [vmem:[%s206 + $0x10] sm:$0xf]
        %v245 = vld [vmem:[%s206 + $0x14] sm:$0xf]
        %v246 = vld [vmem:[#allocation6] sm:$0xf]
        %v247 = vld [vmem:[#allocation6 + $0x4] sm:$0xf]
        %v248 = vld [vmem:[#allocation6 + $0x8] sm:$0xf]
        %v249 = vld [vmem:[#allocation6 + $0xc] sm:$0xf]
        %v250 = vld [vmem:[#allocation6 + $0x10] sm:$0xf]
        %v251 = vld [vmem:[#allocation6 + $0x14] sm:$0xf]
        %v252 = vld [vmem:[#allocation6 + $0x18] sm:$0xf]
        %v253 = vld [vmem:[#allocation6 + $0x1c] sm:$0xf]
        %v254 = vld [vmem:[#allocation6 + $0x20] sm:$0xf]
        %v255 = vld [vmem:[#allocation6 + $0x24] sm:$0xf]
        %v256 = vld [vmem:[#allocation6 + $0x28] sm:$0xf]
        %v257 = vld [vmem:[#allocation6 + $0x2c] sm:$0xf]
        %v258 = vld [vmem:[#allocation6 + $0x30] sm:$0xf]
        %v259 = vld [vmem:[#allocation6 + $0x34] sm:$0xf]
        %v260 = vld [vmem:[#allocation6 + $0x38] sm:$0xf]
        %v261 = vld [vmem:[#allocation6 + $0x3c] sm:$0xf]
        %v268 = vunpack.c.l.b16 %v240
        %v269 = vunpack.c.l.b16 %v241
        %v270 = vunpack.c.l.b16 %v242
        %v271 = vunpack.c.l.b16 %v243
        %v272 = vunpack.c.l.b16 %v244
        %v273 = vunpack.c.l.b16 %v245
        %v274 = vpack.c.b16 %v269, %v268
        %v275 = vpack.c.b16 %v271, %v270
        %v276 = vpack.c.b16 %v273, %v272
        %v296 = vunpack.c.l.b16 %v246
        %v297 = vunpack.c.l.b16 %v247
        %v298 = vunpack.c.l.b16 %v248
        %v299 = vunpack.c.l.b16 %v249
        %v300 = vunpack.c.l.b16 %v250
        %v301 = vunpack.c.l.b16 %v251
        %v302 = vunpack.c.l.b16 %v252
        %v303 = vunpack.c.l.b16 %v253
        %v304 = vunpack.c.l.b16 %v254
        %v305 = vunpack.c.l.b16 %v255
        %v306 = vunpack.c.l.b16 %v256
        %v307 = vunpack.c.l.b16 %v257
        %v308 = vunpack.c.l.b16 %v258
        %v309 = vunpack.c.l.b16 %v259
        %v310 = vunpack.c.l.b16 %v260
        %v311 = vunpack.c.l.b16 %v261
        %v312 = vpack.c.b16 %v297, %v296
        %v313 = vpack.c.b16 %v299, %v298
        %v314 = vpack.c.b16 %v301, %v300
        %v315 = vpack.c.b16 %v303, %v302
        %v316 = vpack.c.b16 %v305, %v304
        %v317 = vpack.c.b16 %v307, %v306
        %v318 = vpack.c.b16 %v309, %v308
        %v319 = vpack.c.b16 %v311, %v310
        %328 = vmatprep.subr.bf16.mxu0 0
        %329 = vmatpush1.bf16.msra.mxu0 %v312
        %330 = vmatprep.subr.bf16.mxu0 0
        %331 = vmatpush1.bf16.msra.mxu0 %v313
        %332 = vmatprep.subr.bf16.mxu0 0
        %333 = vmatpush1.bf16.msra.mxu0 %v314
        %334 = vmatprep.subr.bf16.mxu0 0
        %335 = vmatpush1.bf16.msra.mxu0 %v315
        %336 = vmatprep.subr.bf16.mxu0 0
        %337 = vmatpush1.bf16.msra.mxu0 %v316
        %338 = vmatprep.subr.bf16.mxu0 0
        %339 = vmatpush1.bf16.msra.mxu0 %v317
        %340 = vmatprep.subr.bf16.mxu0 0
        %341 = vmatpush1.bf16.msra.mxu0 %v318
        %342 = vmatprep.subr.bf16.mxu0 0
        %343 = vmatpush1.bf16.msra.mxu0 %v319
        %344 = vmatprep.subr.bf16.mxu0 0
        %345 = vmatpush1.bf16.msra.mxu0 0
        %346 = vmatprep.subr.bf16.mxu0 0
        %347 = vmatpush1.bf16.msra.mxu0 0
        %348 = vmatprep.subr.bf16.mxu0 0
        %349 = vmatpush1.bf16.msra.mxu0 0
        %350 = vmatprep.subr.bf16.mxu0 0
        %351 = vmatpush1.bf16.msra.mxu0 0
        %352 = vmatprep.subr.bf16.mxu0 0
        %353 = vmatpush1.bf16.msra.mxu0 0
        %354 = vmatprep.subr.bf16.mxu0 0
        %355 = vmatpush1.bf16.msra.mxu0 0
        %356 = vmatprep.subr.bf16.mxu0 0
        %357 = vmatpush1.bf16.msra.mxu0 0
        %358 = vmatprep.subr.bf16.mxu0 0
        %359 = vmatpush1.bf16.msra.mxu0 0
        %360 = vmatprep.mubr.bf16.mxu0 0
        %361 = vmatmul.mubr.bf16.gmra.mrb[0].mxu0 %v274
        %v362 = vpop.f32.mrb[0].mxu0
        %v363 = vadd.f32 0.0, %v362
        %v364 = vpop.f32.mrb[0].mxu0
        %v365 = vpop.f32.mrb[0].mxu0
        %v366 = vadd.f32 0.0, %v365
        %v367 = vpop.f32.mrb[0].mxu0
        %368 = vmatprep.mubr.bf16.mxu0 0
        %369 = vmatmul.mubr.bf16.gmra.mrb[0].mxu0 %v275
        %v370 = vpop.f32.mrb[0].mxu0
        %v371 = vadd.f32 0.0, %v370
        %v372 = vpop.f32.mrb[0].mxu0
        %v373 = vpop.f32.mrb[0].mxu0
        %v374 = vadd.f32 0.0, %v373
        %v375 = vpop.f32.mrb[0].mxu0
        %376 = vmatprep.mubr.bf16.mxu0 0
        %377 = vmatmul.mubr.bf16.gmra.mrb[0].mxu0 %v276
        %v378 = vpop.f32.mrb[0].mxu0
        %v379 = vadd.f32 0.0, %v378
        %v380 = vpop.f32.mrb[0].mxu0
        %v381 = vpop.f32.mrb[0].mxu0
        %v382 = vadd.f32 0.0, %v381
        %v383 = vpop.f32.mrb[0].mxu0
        %384 = vdwg.mxu0
        %385 = vst [vmem:[#allocation2] sm:$0xff] %v363
        %386 = vst [vmem:[#allocation2 + $0x8] sm:$0xff] %v366
        %387 = vst [vmem:[#allocation2 + $0x10] sm:$0xff] %v371
        %388 = vst [vmem:[#allocation2 + $0x18] sm:$0xff] %v374
        %389 = vst [vmem:[#allocation2 + $0x20] sm:$0xff] %v379
        %390 = vst [vmem:[#allocation2 + $0x28] sm:$0xff] %v382
        %v391 = vld [vmem:[%s206] sm:$0xf]
        %v392 = vld [vmem:[%s206 + $0x4] sm:$0xf]
        %v393 = vld [vmem:[%s206 + $0x8] sm:$0xf]
        %v394 = vld [vmem:[%s206 + $0xc] sm:$0xf]
        %v395 = vld [vmem:[%s206 + $0x10] sm:$0xf]
        %v396 = vld [vmem:[%s206 + $0x14] sm:$0xf]
        %v397 = vld [vmem:[%s206 + $0x18] sm:$0x1]
        %s398 = scalar_lea.vmem [#allocation6], 64
        %v399 = vld [vmem:[%s398] sm:$0xf]
        %v400 = vld [vmem:[%s398 + $0x4] sm:$0xf]
        %v401 = vld [vmem:[%s398 + $0x8] sm:$0xf]
        %v402 = vld [vmem:[%s398 + $0xc] sm:$0xf]
        %v403 = vld [vmem:[%s398 + $0x10] sm:$0xf]
        %v404 = vld [vmem:[%s398 + $0x14] sm:$0xf]
        %v405 = vld [vmem:[%s398 + $0x18] sm:$0xf]
        %v406 = vld [vmem:[%s398 + $0x1c] sm:$0xf]
        %v407 = vld [vmem:[%s398 + $0x20] sm:$0xf]
        %v408 = vld [vmem:[%s398 + $0x24] sm:$0xf]
        %v409 = vld [vmem:[%s398 + $0x28] sm:$0xf]
        %v410 = vld [vmem:[%s398 + $0x2c] sm:$0xf]
        %v411 = vld [vmem:[%s398 + $0x30] sm:$0xf]
        %v412 = vld [vmem:[%s398 + $0x34] sm:$0xf]
        %v413 = vld [vmem:[%s398 + $0x38] sm:$0xf]
        %v414 = vld [vmem:[%s398 + $0x3c] sm:$0xf]
        %v422 = vunpack.c.l.b16 %v391
        %v423 = vunpack.c.l.b16 %v392
        %v424 = vunpack.c.l.b16 %v393
        %v425 = vunpack.c.l.b16 %v394
        %v426 = vunpack.c.l.b16 %v395
        %v427 = vunpack.c.l.b16 %v396
        %v428 = vunpack.c.l.b16 %v397
        %v429 = vpack.c.b16 %v423, %v422
        %v430 = vpack.c.b16 %v425, %v424
        %v431 = vpack.c.b16 %v427, %v426
        %v432 = vpack.c.b16 %v428, %v428
        %vm433 = vsmask.f32 7424
        %v435 = vshrl.u32 %v429, 16
        %v437 = vshll.u32 %v429, 16
        %v439 = vrot.slane %v437, 1
        %v440 = vor.u32 %v435, %v439
        %v442 = vshll.u32 %v430, 16
        %v444 = vrot.slane %v442, 1
        %v445 = vsel %vm433, %v440, %v444
        %v446 = vshrl.u32 %v430, 16
        %v448 = vor.u32 %v446, %v444
        %v450 = vshll.u32 %v431, 16
        %v452 = vrot.slane %v450, 1
        %v453 = vsel %vm433, %v448, %v452
        %v454 = vshrl.u32 %v431, 16
        %v456 = vor.u32 %v454, %v452
        %v458 = vshll.u32 %v432, 16
        %v460 = vrot.slane %v458, 1
        %v461 = vsel %vm433, %v456, %v460
        %v481 = vunpack.c.l.b16 %v399
        %v482 = vunpack.c.l.b16 %v400
        %v483 = vunpack.c.l.b16 %v401
        %v484 = vunpack.c.l.b16 %v402
        %v485 = vunpack.c.l.b16 %v403
        %v486 = vunpack.c.l.b16 %v404
        %v487 = vunpack.c.l.b16 %v405
        %v488 = vunpack.c.l.b16 %v406
        %v489 = vunpack.c.l.b16 %v407
        %v490 = vunpack.c.l.b16 %v408
        %v491 = vunpack.c.l.b16 %v409
        %v492 = vunpack.c.l.b16 %v410
        %v493 = vunpack.c.l.b16 %v411
        %v494 = vunpack.c.l.b16 %v412
        %v495 = vunpack.c.l.b16 %v413
        %v496 = vunpack.c.l.b16 %v414
        %v497 = vpack.c.b16 %v482, %v481
        %v498 = vpack.c.b16 %v484, %v483
        %v499 = vpack.c.b16 %v486, %v485
        %v500 = vpack.c.b16 %v488, %v487
        %v501 = vpack.c.b16 %v490, %v489
        %v502 = vpack.c.b16 %v492, %v491
        %v503 = vpack.c.b16 %v494, %v493
        %v504 = vpack.c.b16 %v496, %v495
        %513 = vmatprep.subr.bf16.mxu0 0
        %514 = vmatpush1.bf16.msra.mxu0 %v497
        %515 = vmatprep.subr.bf16.mxu0 0
        %516 = vmatpush1.bf16.msra.mxu0 %v498
        %517 = vmatprep.subr.bf16.mxu0 0
        %518 = vmatpush1.bf16.msra.mxu0 %v499
        %519 = vmatprep.subr.bf16.mxu0 0
        %520 = vmatpush1.bf16.msra.mxu0 %v500
        %521 = vmatprep.subr.bf16.mxu0 0
        %522 = vmatpush1.bf16.msra.mxu0 %v501
        %523 = vmatprep.subr.bf16.mxu0 0
        %524 = vmatpush1.bf16.msra.mxu0 %v502
        %525 = vmatprep.subr.bf16.mxu0 0
        %526 = vmatpush1.bf16.msra.mxu0 %v503
        %527 = vmatprep.subr.bf16.mxu0 0
        %528 = vmatpush1.bf16.msra.mxu0 %v504
        %529 = vmatprep.subr.bf16.mxu0 0
        %530 = vmatpush1.bf16.msra.mxu0 0
        %531 = vmatprep.subr.bf16.mxu0 0
        %532 = vmatpush1.bf16.msra.mxu0 0
        %533 = vmatprep.subr.bf16.mxu0 0
        %534 = vmatpush1.bf16.msra.mxu0 0
        %535 = vmatprep.subr.bf16.mxu0 0
        %536 = vmatpush1.bf16.msra.mxu0 0
        %537 = vmatprep.subr.bf16.mxu0 0
        %538 = vmatpush1.bf16.msra.mxu0 0
        %539 = vmatprep.subr.bf16.mxu0 0
        %540 = vmatpush1.bf16.msra.mxu0 0
        %541 = vmatprep.subr.bf16.mxu0 0
        %542 = vmatpush1.bf16.msra.mxu0 0
        %543 = vmatprep.subr.bf16.mxu0 0
        %544 = vmatpush1.bf16.msra.mxu0 0
        %545 = vmatprep.mubr.bf16.mxu0 0
        %546 = vmatmul.mubr.bf16.gmra.mrb[0].mxu0 %v445
        %v547 = vpop.f32.mrb[0].mxu0
        %v548 = vadd.f32 0.0, %v547
        %v549 = vpop.f32.mrb[0].mxu0
        %v550 = vpop.f32.mrb[0].mxu0
        %v551 = vadd.f32 0.0, %v550
        %v552 = vpop.f32.mrb[0].mxu0
        %553 = vmatprep.mubr.bf16.mxu0 0
        %554 = vmatmul.mubr.bf16.gmra.mrb[0].mxu0 %v453
        %v555 = vpop.f32.mrb[0].mxu0
        %v556 = vadd.f32 0.0, %v555
        %v557 = vpop.f32.mrb[0].mxu0
        %v558 = vpop.f32.mrb[0].mxu0
        %v559 = vadd.f32 0.0, %v558
        %v560 = vpop.f32.mrb[0].mxu0
        %561 = vmatprep.mubr.bf16.mxu0 0
        %562 = vmatmul.mubr.bf16.gmra.mrb[0].mxu0 %v461
        %v563 = vpop.f32.mrb[0].mxu0
        %v564 = vadd.f32 0.0, %v563
        %v565 = vpop.f32.mrb[0].mxu0
        %v566 = vpop.f32.mrb[0].mxu0
        %v567 = vadd.f32 0.0, %v566
        %v568 = vpop.f32.mrb[0].mxu0
        %569 = vdwg.mxu0
        %v570 = vld [vmem:[#allocation2] sm:$0xff]
        %v571 = vld [vmem:[#allocation2 + $0x8] sm:$0xff]
        %v572 = vld [vmem:[#allocation2 + $0x10] sm:$0xff]
        %v573 = vld [vmem:[#allocation2 + $0x18] sm:$0xff]
        %v574 = vld [vmem:[#allocation2 + $0x20] sm:$0xff]
        %v575 = vld [vmem:[#allocation2 + $0x28] sm:$0xff]
        %v576 = vadd.f32 %v570, %v548
        %v577 = vadd.f32 %v571, %v551
        %v578 = vadd.f32 %v572, %v556
        %v579 = vadd.f32 %v573, %v559
        %v580 = vadd.f32 %v574, %v564
        %v581 = vadd.f32 %v575, %v567
        %582 = vst [vmem:[#allocation2] sm:$0xff] %v576
        %583 = vst [vmem:[#allocation2 + $0x8] sm:$0xff] %v577
        %584 = vst [vmem:[#allocation2 + $0x10] sm:$0xff] %v578
        %585 = vst [vmem:[#allocation2 + $0x18] sm:$0xff] %v579
        %586 = vst [vmem:[#allocation2 + $0x20] sm:$0xff] %v580
        %587 = vst [vmem:[#allocation2 + $0x28] sm:$0xff] %v581
        %v588 = vld [vmem:[%s206] sm:$0xe]
        %v589 = vld [vmem:[%s206 + $0x4] sm:$0xf]
        %v590 = vld [vmem:[%s206 + $0x8] sm:$0xf]
        %v591 = vld [vmem:[%s206 + $0xc] sm:$0xf]
        %v592 = vld [vmem:[%s206 + $0x10] sm:$0xf]
        %v593 = vld [vmem:[%s206 + $0x14] sm:$0xf]
        %v594 = vld [vmem:[%s206 + $0x18] sm:$0x1]
        %s595 = scalar_lea.vmem [#allocation6], 128
        %v596 = vld [vmem:[%s595] sm:$0xf]
        %v597 = vld [vmem:[%s595 + $0x4] sm:$0xf]
        %v598 = vld [vmem:[%s595 + $0x8] sm:$0xf]
        %v599 = vld [vmem:[%s595 + $0xc] sm:$0xf]
        %v600 = vld [vmem:[%s595 + $0x10] sm:$0xf]
        %v601 = vld [vmem:[%s595 + $0x14] sm:$0xf]
        %v602 = vld [vmem:[%s595 + $0x18] sm:$0xf]
        %v603 = vld [vmem:[%s595 + $0x1c] sm:$0xf]
        %v604 = vld [vmem:[%s595 + $0x20] sm:$0xf]
        %v605 = vld [vmem:[%s595 + $0x24] sm:$0xf]
        %v606 = vld [vmem:[%s595 + $0x28] sm:$0xf]
        %v607 = vld [vmem:[%s595 + $0x2c] sm:$0xf]
        %v608 = vld [vmem:[%s595 + $0x30] sm:$0xf]
        %v609 = vld [vmem:[%s595 + $0x34] sm:$0xf]
        %v610 = vld [vmem:[%s595 + $0x38] sm:$0xf]
        %v611 = vld [vmem:[%s595 + $0x3c] sm:$0xf]
        %v619 = vunpack.c.l.b16 %v588
        %v620 = vunpack.c.l.b16 %v589
        %v621 = vunpack.c.l.b16 %v590
        %v622 = vunpack.c.l.b16 %v591
        %v623 = vunpack.c.l.b16 %v592
        %v624 = vunpack.c.l.b16 %v593
        %v625 = vunpack.c.l.b16 %v594
        %v626 = vpack.c.b16 %v620, %v619
        %v627 = vpack.c.b16 %v622, %v621
        %v628 = vpack.c.b16 %v624, %v623
        %v629 = vpack.c.b16 %v625, %v625
        %vm630 = vcmask 1046528
        %v631 = vrot.slane %v626, 1
        %v632 = vrot.slane %v627, 1
        %v633 = vsel %vm630, %v631, %v632
        %v634 = vrot.slane %v628, 1
        %v635 = vsel %vm630, %v632, %v634
        %v636 = vrot.slane %v629, 1
        %v637 = vsel %vm630, %v634, %v636
        %v657 = vunpack.c.l.b16 %v596
        %v658 = vunpack.c.l.b16 %v597
        %v659 = vunpack.c.l.b16 %v598
        %v660 = vunpack.c.l.b16 %v599
        %v661 = vunpack.c.l.b16 %v600
        %v662 = vunpack.c.l.b16 %v601
        %v663 = vunpack.c.l.b16 %v602
        %v664 = vunpack.c.l.b16 %v603
        %v665 = vunpack.c.l.b16 %v604
        %v666 = vunpack.c.l.b16 %v605
        %v667 = vunpack.c.l.b16 %v606
        %v668 = vunpack.c.l.b16 %v607
        %v669 = vunpack.c.l.b16 %v608
        %v670 = vunpack.c.l.b16 %v609
        %v671 = vunpack.c.l.b16 %v610
        %v672 = vunpack.c.l.b16 %v611
        %v673 = vpack.c.b16 %v658, %v657
        %v674 = vpack.c.b16 %v660, %v659
        %v675 = vpack.c.b16 %v662, %v661
        %v676 = vpack.c.b16 %v664, %v663
        %v677 = vpack.c.b16 %v666, %v665
        %v678 = vpack.c.b16 %v668, %v667
        %v679 = vpack.c.b16 %v670, %v669
        %v680 = vpack.c.b16 %v672, %v671
        %689 = vmatprep.subr.bf16.mxu0 0
        %690 = vmatpush1.bf16.msra.mxu0 %v673
        %691 = vmatprep.subr.bf16.mxu0 0
        %692 = vmatpush1.bf16.msra.mxu0 %v674
        %693 = vmatprep.subr.bf16.mxu0 0
        %694 = vmatpush1.bf16.msra.mxu0 %v675
        %695 = vmatprep.subr.bf16.mxu0 0
        %696 = vmatpush1.bf16.msra.mxu0 %v676
        %697 = vmatprep.subr.bf16.mxu0 0
        %698 = vmatpush1.bf16.msra.mxu0 %v677
        %699 = vmatprep.subr.bf16.mxu0 0
        %700 = vmatpush1.bf16.msra.mxu0 %v678
        %701 = vmatprep.subr.bf16.mxu0 0
        %702 = vmatpush1.bf16.msra.mxu0 %v679
        %703 = vmatprep.subr.bf16.mxu0 0
        %704 = vmatpush1.bf16.msra.mxu0 %v680
        %705 = vmatprep.subr.bf16.mxu0 0
        %706 = vmatpush1.bf16.msra.mxu0 0
        %707 = vmatprep.subr.bf16.mxu0 0
        %708 = vmatpush1.bf16.msra.mxu0 0
        %709 = vmatprep.subr.bf16.mxu0 0
        %710 = vmatpush1.bf16.msra.mxu0 0
        %711 = vmatprep.subr.bf16.mxu0 0
        %712 = vmatpush1.bf16.msra.mxu0 0
        %713 = vmatprep.subr.bf16.mxu0 0
        %714 = vmatpush1.bf16.msra.mxu0 0
        %715 = vmatprep.subr.bf16.mxu0 0
        %716 = vmatpush1.bf16.msra.mxu0 0
        %717 = vmatprep.subr.bf16.mxu0 0
        %718 = vmatpush1.bf16.msra.mxu0 0
        %719 = vmatprep.subr.bf16.mxu0 0
        %720 = vmatpush1.bf16.msra.mxu0 0
        %721 = vmatprep.mubr.bf16.mxu0 0
        %722 = vmatmul.mubr.bf16.gmra.mrb[0].mxu0 %v633
        %v723 = vpop.f32.mrb[0].mxu0
        %v724 = vadd.f32 0.0, %v723
        %v725 = vpop.f32.mrb[0].mxu0
        %v726 = vpop.f32.mrb[0].mxu0
        %v727 = vadd.f32 0.0, %v726
        %v728 = vpop.f32.mrb[0].mxu0
        %729 = vmatprep.mubr.bf16.mxu0 0
        %730 = vmatmul.mubr.bf16.gmra.mrb[0].mxu0 %v635
        %v731 = vpop.f32.mrb[0].mxu0
        %v732 = vadd.f32 0.0, %v731
        %v733 = vpop.f32.mrb[0].mxu0
        %v734 = vpop.f32.mrb[0].mxu0
        %v735 = vadd.f32 0.0, %v734
        %v736 = vpop.f32.mrb[0].mxu0
        %737 = vmatprep.mubr.bf16.mxu0 0
        %738 = vmatmul.mubr.bf16.gmra.mrb[0].mxu0 %v637
        %v739 = vpop.f32.mrb[0].mxu0
        %v740 = vadd.f32 0.0, %v739
        %v741 = vpop.f32.mrb[0].mxu0
        %v742 = vpop.f32.mrb[0].mxu0
        %v743 = vadd.f32 0.0, %v742
        %v744 = vpop.f32.mrb[0].mxu0
        %745 = vdwg.mxu0
        %v746 = vld [vmem:[#allocation2] sm:$0xff]
        %v747 = vld [vmem:[#allocation2 + $0x8] sm:$0xff]
        %v748 = vld [vmem:[#allocation2 + $0x10] sm:$0xff]
        %v749 = vld [vmem:[#allocation2 + $0x18] sm:$0xff]
        %v750 = vld [vmem:[#allocation2 + $0x20] sm:$0xff]
        %v751 = vld [vmem:[#allocation2 + $0x28] sm:$0xff]
        %v752 = vadd.f32 %v746, %v724
        %v753 = vadd.f32 %v747, %v727
        %v754 = vadd.f32 %v748, %v732
        %v755 = vadd.f32 %v749, %v735
        %v756 = vadd.f32 %v750, %v740
        %v757 = vadd.f32 %v751, %v743
        %758 = vst [vmem:[#allocation2] sm:$0xff] %v752
        %759 = vst [vmem:[#allocation2 + $0x8] sm:$0xff] %v753
        %760 = vst [vmem:[#allocation2 + $0x10] sm:$0xff] %v754
        %761 = vst [vmem:[#allocation2 + $0x18] sm:$0xff] %v755
        %762 = vst [vmem:[#allocation2 + $0x20] sm:$0xff] %v756
        %763 = vst [vmem:[#allocation2 + $0x28] sm:$0xff] %v757
        %v764 = vld [vmem:[%s206] sm:$0x8]
        %v765 = vld [vmem:[%s206 + $0x4] sm:$0xf]
        %v766 = vld [vmem:[%s206 + $0x8] sm:$0xf]
        %v767 = vld [vmem:[%s206 + $0xc] sm:$0xf]
        %v768 = vld [vmem:[%s206 + $0x10] sm:$0xf]
        %v769 = vld [vmem:[%s206 + $0x14] sm:$0xf]
        %v770 = vld [vmem:[%s206 + $0x18] sm:$0xf]
        %s771 = scalar_lea.vmem [#allocation6], 192
        %v772 = vld [vmem:[%s771] sm:$0xf]
        %v773 = vld [vmem:[%s771 + $0x4] sm:$0xf]
        %v774 = vld [vmem:[%s771 + $0x8] sm:$0xf]
        %v775 = vld [vmem:[%s771 + $0xc] sm:$0xf]
        %v776 = vld [vmem:[%s771 + $0x10] sm:$0xf]
        %v777 = vld [vmem:[%s771 + $0x14] sm:$0xf]
        %v778 = vld [vmem:[%s771 + $0x18] sm:$0xf]
        %v779 = vld [vmem:[%s771 + $0x1c] sm:$0xf]
        %v780 = vld [vmem:[%s771 + $0x20] sm:$0xf]
        %v781 = vld [vmem:[%s771 + $0x24] sm:$0xf]
        %v782 = vld [vmem:[%s771 + $0x28] sm:$0xf]
        %v783 = vld [vmem:[%s771 + $0x2c] sm:$0xf]
        %v784 = vld [vmem:[%s771 + $0x30] sm:$0xf]
        %v785 = vld [vmem:[%s771 + $0x34] sm:$0xf]
        %v786 = vld [vmem:[%s771 + $0x38] sm:$0xf]
        %v787 = vld [vmem:[%s771 + $0x3c] sm:$0xf]
        %v795 = vunpack.c.l.b16 %v764
        %v796 = vunpack.c.l.b16 %v765
        %v797 = vunpack.c.l.b16 %v766
        %v798 = vunpack.c.l.b16 %v767
        %v799 = vunpack.c.l.b16 %v768
        %v800 = vunpack.c.l.b16 %v769
        %v801 = vunpack.c.l.b16 %v770
        %v802 = vpack.c.b16 %v796, %v795
        %v803 = vpack.c.b16 %v798, %v797
        %v804 = vpack.c.b16 %v800, %v799
        %v805 = vpack.c.b16 %v801, %v801
        %vm806 = vsmask.f32 4352
        %v808 = vshrl.u32 %v802, 16
        %v810 = vrot.slane %v808, 3
        %v811 = vshll.u32 %v802, 16
        %v813 = vrot.slane %v811, 4
        %v814 = vor.u32 %v810, %v813
        %v816 = vshrl.u32 %v803, 16
        %v818 = vrot.slane %v816, 3
        %v819 = vshll.u32 %v803, 16
        %v821 = vrot.slane %v819, 4
        %v822 = vor.u32 %v818, %v821
        %v823 = vsel %vm806, %v814, %v822
        %v825 = vshrl.u32 %v804, 16
        %v827 = vrot.slane %v825, 3
        %v828 = vshll.u32 %v804, 16
        %v830 = vrot.slane %v828, 4
        %v831 = vor.u32 %v827, %v830
        %v832 = vsel %vm806, %v822, %v831
        %v834 = vshrl.u32 %v805, 16
        %v836 = vrot.slane %v834, 3
        %v837 = vshll.u32 %v805, 16
        %v839 = vrot.slane %v837, 4
        %v840 = vor.u32 %v836, %v839
        %v841 = vsel %vm806, %v831, %v840
        %v861 = vunpack.c.l.b16 %v772
        %v862 = vunpack.c.l.b16 %v773
        %v863 = vunpack.c.l.b16 %v774
        %v864 = vunpack.c.l.b16 %v775
        %v865 = vunpack.c.l.b16 %v776
        %v866 = vunpack.c.l.b16 %v777
        %v867 = vunpack.c.l.b16 %v778
        %v868 = vunpack.c.l.b16 %v779
        %v869 = vunpack.c.l.b16 %v780
        %v870 = vunpack.c.l.b16 %v781
        %v871 = vunpack.c.l.b16 %v782
        %v872 = vunpack.c.l.b16 %v783
        %v873 = vunpack.c.l.b16 %v784
        %v874 = vunpack.c.l.b16 %v785
        %v875 = vunpack.c.l.b16 %v786
        %v876 = vunpack.c.l.b16 %v787
        %v877 = vpack.c.b16 %v862, %v861
        %v878 = vpack.c.b16 %v864, %v863
        %v879 = vpack.c.b16 %v866, %v865
        %v880 = vpack.c.b16 %v868, %v867
        %v881 = vpack.c.b16 %v870, %v869
        %v882 = vpack.c.b16 %v872, %v871
        %v883 = vpack.c.b16 %v874, %v873
        %v884 = vpack.c.b16 %v876, %v875
        %893 = vmatprep.subr.bf16.mxu0 0
        %894 = vmatpush1.bf16.msra.mxu0 %v877
        %895 = vmatprep.subr.bf16.mxu0 0
        %896 = vmatpush1.bf16.msra.mxu0 %v878
        %897 = vmatprep.subr.bf16.mxu0 0
        %898 = vmatpush1.bf16.msra.mxu0 %v879
        %899 = vmatprep.subr.bf16.mxu0 0
        %900 = vmatpush1.bf16.msra.mxu0 %v880
        %901 = vmatprep.subr.bf16.mxu0 0
        %902 = vmatpush1.bf16.msra.mxu0 %v881
        %903 = vmatprep.subr.bf16.mxu0 0
        %904 = vmatpush1.bf16.msra.mxu0 %v882
        %905 = vmatprep.subr.bf16.mxu0 0
        %906 = vmatpush1.bf16.msra.mxu0 %v883
        %907 = vmatprep.subr.bf16.mxu0 0
        %908 = vmatpush1.bf16.msra.mxu0 %v884
        %909 = vmatprep.subr.bf16.mxu0 0
        %910 = vmatpush1.bf16.msra.mxu0 0
        %911 = vmatprep.subr.bf16.mxu0 0
        %912 = vmatpush1.bf16.msra.mxu0 0
        %913 = vmatprep.subr.bf16.mxu0 0
        %914 = vmatpush1.bf16.msra.mxu0 0
        %915 = vmatprep.subr.bf16.mxu0 0
        %916 = vmatpush1.bf16.msra.mxu0 0
        %917 = vmatprep.subr.bf16.mxu0 0
        %918 = vmatpush1.bf16.msra.mxu0 0
        %919 = vmatprep.subr.bf16.mxu0 0
        %920 = vmatpush1.bf16.msra.mxu0 0
        %921 = vmatprep.subr.bf16.mxu0 0
        %922 = vmatpush1.bf16.msra.mxu0 0
        %923 = vmatprep.subr.bf16.mxu0 0
        %924 = vmatpush1.bf16.msra.mxu0 0
        %925 = vmatprep.mubr.bf16.mxu0 0
        %926 = vmatmul.mubr.bf16.gmra.mrb[0].mxu0 %v823
        %v927 = vpop.f32.mrb[0].mxu0
        %v928 = vadd.f32 0.0, %v927
        %v929 = vpop.f32.mrb[0].mxu0
        %v930 = vpop.f32.mrb[0].mxu0
        %v931 = vadd.f32 0.0, %v930
        %v932 = vpop.f32.mrb[0].mxu0
        %933 = vmatprep.mubr.bf16.mxu0 0
        %934 = vmatmul.mubr.bf16.gmra.mrb[0].mxu0 %v832
        %v935 = vpop.f32.mrb[0].mxu0
        %v936 = vadd.f32 0.0, %v935
        %v937 = vpop.f32.mrb[0].mxu0
        %v938 = vpop.f32.mrb[0].mxu0
        %v939 = vadd.f32 0.0, %v938
        %v940 = vpop.f32.mrb[0].mxu0
        %941 = vmatprep.mubr.bf16.mxu0 0
        %942 = vmatmul.mubr.bf16.gmra.mrb[0].mxu0 %v841
        %v943 = vpop.f32.mrb[0].mxu0
        %v944 = vadd.f32 0.0, %v943
        %v945 = vpop.f32.mrb[0].mxu0
        %v946 = vpop.f32.mrb[0].mxu0
        %v947 = vadd.f32 0.0, %v946
        %v948 = vpop.f32.mrb[0].mxu0
        %949 = vdwg.mxu0
        %v950 = vld [vmem:[#allocation2] sm:$0xff]
        %v951 = vld [vmem:[#allocation2 + $0x8] sm:$0xff]
        %v952 = vld [vmem:[#allocation2 + $0x10] sm:$0xff]
        %v953 = vld [vmem:[#allocation2 + $0x18] sm:$0xff]
        %v954 = vld [vmem:[#allocation2 + $0x20] sm:$0xff]
        %v955 = vld [vmem:[#allocation2 + $0x28] sm:$0xff]
        %v956 = vadd.f32 %v950, %v928
        %v957 = vadd.f32 %v951, %v931
        %v958 = vadd.f32 %v952, %v936
        %v959 = vadd.f32 %v953, %v939
        %v960 = vadd.f32 %v954, %v944
        %v961 = vadd.f32 %v955, %v947
        %962 = vst [vmem:[#allocation2] sm:$0xff] %v956
        %963 = vst [vmem:[#allocation2 + $0x8] sm:$0xff] %v957
        %964 = vst [vmem:[#allocation2 + $0x10] sm:$0xff] %v958
        %965 = vst [vmem:[#allocation2 + $0x18] sm:$0xff] %v959
        %966 = vst [vmem:[#allocation2 + $0x20] sm:$0xff] %v960
        %967 = vst [vmem:[#allocation2 + $0x28] sm:$0xff] %v961
        %v968 = vld [vmem:[%s206 + $0x4] sm:$0xf]
        %v969 = vld [vmem:[%s206 + $0x8] sm:$0xf]
        %v970 = vld [vmem:[%s206 + $0xc] sm:$0xf]
        %v971 = vld [vmem:[%s206 + $0x10] sm:$0xf]
        %v972 = vld [vmem:[%s206 + $0x14] sm:$0xf]
        %v973 = vld [vmem:[%s206 + $0x18] sm:$0xf]
        %s974 = scalar_lea.vmem [#allocation6], 256
        %v975 = vld [vmem:[%s974] sm:$0xf]
        %v976 = vld [vmem:[%s974 + $0x4] sm:$0xf]
        %v977 = vld [vmem:[%s974 + $0x8] sm:$0xf]
        %v978 = vld [vmem:[%s974 + $0xc] sm:$0xf]
        %v979 = vld [vmem:[%s974 + $0x10] sm:$0xf]
        %v980 = vld [vmem:[%s974 + $0x14] sm:$0xf]
        %v981 = vld [vmem:[%s974 + $0x18] sm:$0xf]
        %v982 = vld [vmem:[%s974 + $0x1c] sm:$0xf]
        %v983 = vld [vmem:[%s974 + $0x20] sm:$0xf]
        %v984 = vld [vmem:[%s974 + $0x24] sm:$0xf]
        %v985 = vld [vmem:[%s974 + $0x28] sm:$0xf]
        %v986 = vld [vmem:[%s974 + $0x2c] sm:$0xf]
        %v987 = vld [vmem:[%s974 + $0x30] sm:$0xf]
        %v988 = vld [vmem:[%s974 + $0x34] sm:$0xf]
        %v989 = vld [vmem:[%s974 + $0x38] sm:$0xf]
        %v990 = vld [vmem:[%s974 + $0x3c] sm:$0xf]
        %v997 = vunpack.c.l.b16 %v968
        %v998 = vunpack.c.l.b16 %v969
        %v999 = vunpack.c.l.b16 %v970
        %v1000 = vunpack.c.l.b16 %v971
        %v1001 = vunpack.c.l.b16 %v972
        %v1002 = vunpack.c.l.b16 %v973
        %v1003 = vpack.c.b16 %v998, %v997
        %v1004 = vpack.c.b16 %v1000, %v999
        %v1005 = vpack.c.b16 %v1002, %v1001
        %v1025 = vunpack.c.l.b16 %v975
        %v1026 = vunpack.c.l.b16 %v976
        %v1027 = vunpack.c.l.b16 %v977
        %v1028 = vunpack.c.l.b16 %v978
        %v1029 = vunpack.c.l.b16 %v979
        %v1030 = vunpack.c.l.b16 %v980
        %v1031 = vunpack.c.l.b16 %v981
        %v1032 = vunpack.c.l.b16 %v982
        %v1033 = vunpack.c.l.b16 %v983
        %v1034 = vunpack.c.l.b16 %v984
        %v1035 = vunpack.c.l.b16 %v985
        %v1036 = vunpack.c.l.b16 %v986
        %v1037 = vunpack.c.l.b16 %v987
        %v1038 = vunpack.c.l.b16 %v988
        %v1039 = vunpack.c.l.b16 %v989
        %v1040 = vunpack.c.l.b16 %v990
        %v1041 = vpack.c.b16 %v1026, %v1025
        %v1042 = vpack.c.b16 %v1028, %v1027
        %v1043 = vpack.c.b16 %v1030, %v1029
        %v1044 = vpack.c.b16 %v1032, %v1031
        %v1045 = vpack.c.b16 %v1034, %v1033
        %v1046 = vpack.c.b16 %v1036, %v1035
        %v1047 = vpack.c.b16 %v1038, %v1037
        %v1048 = vpack.c.b16 %v1040, %v1039
        %1057 = vmatprep.subr.bf16.mxu0 0
        %1058 = vmatpush1.bf16.msra.mxu0 %v1041
        %1059 = vmatprep.subr.bf16.mxu0 0
        %1060 = vmatpush1.bf16.msra.mxu0 %v1042
        %1061 = vmatprep.subr.bf16.mxu0 0
        %1062 = vmatpush1.bf16.msra.mxu0 %v1043
        %1063 = vmatprep.subr.bf16.mxu0 0
        %1064 = vmatpush1.bf16.msra.mxu0 %v1044
        %1065 = vmatprep.subr.bf16.mxu0 0
        %1066 = vmatpush1.bf16.msra.mxu0 %v1045
        %1067 = vmatprep.subr.bf16.mxu0 0
        %1068 = vmatpush1.bf16.msra.mxu0 %v1046
        %1069 = vmatprep.subr.bf16.mxu0 0
        %1070 = vmatpush1.bf16.msra.mxu0 %v1047
        %1071 = vmatprep.subr.bf16.mxu0 0
        %1072 = vmatpush1.bf16.msra.mxu0 %v1048
        %1073 = vmatprep.subr.bf16.mxu0 0
        %1074 = vmatpush1.bf16.msra.mxu0 0
        %1075 = vmatprep.subr.bf16.mxu0 0
        %1076 = vmatpush1.bf16.msra.mxu0 0
        %1077 = vmatprep.subr.bf16.mxu0 0
        %1078 = vmatpush1.bf16.msra.mxu0 0
        %1079 = vmatprep.subr.bf16.mxu0 0
        %1080 = vmatpush1.bf16.msra.mxu0 0
        %1081 = vmatprep.subr.bf16.mxu0 0
        %1082 = vmatpush1.bf16.msra.mxu0 0
        %1083 = vmatprep.subr.bf16.mxu0 0
        %1084 = vmatpush1.bf16.msra.mxu0 0
        %1085 = vmatprep.subr.bf16.mxu0 0
        %1086 = vmatpush1.bf16.msra.mxu0 0
        %1087 = vmatprep.subr.bf16.mxu0 0
        %1088 = vmatpush1.bf16.msra.mxu0 0
        %1089 = vmatprep.mubr.bf16.mxu0 0
        %1090 = vmatmul.mubr.bf16.gmra.mrb[0].mxu0 %v1003
        %v1091 = vpop.f32.mrb[0].mxu0
        %v1092 = vadd.f32 0.0, %v1091
        %v1093 = vpop.f32.mrb[0].mxu0
        %v1094 = vpop.f32.mrb[0].mxu0
        %v1095 = vadd.f32 0.0, %v1094
        %v1096 = vpop.f32.mrb[0].mxu0
        %1097 = vmatprep.mubr.bf16.mxu0 0
        %1098 = vmatmul.mubr.bf16.gmra.mrb[0].mxu0 %v1004
        %v1099 = vpop.f32.mrb[0].mxu0
        %v1100 = vadd.f32 0.0, %v1099
        %v1101 = vpop.f32.mrb[0].mxu0
        %v1102 = vpop.f32.mrb[0].mxu0
        %v1103 = vadd.f32 0.0, %v1102
        %v1104 = vpop.f32.mrb[0].mxu0
        %1105 = vmatprep.mubr.bf16.mxu0 0
        %1106 = vmatmul.mubr.bf16.gmra.mrb[0].mxu0 %v1005
        %v1107 = vpop.f32.mrb[0].mxu0
        %v1108 = vadd.f32 0.0, %v1107
        %v1109 = vpop.f32.mrb[0].mxu0
        %v1110 = vpop.f32.mrb[0].mxu0
        %v1111 = vadd.f32 0.0, %v1110
        %v1112 = vpop.f32.mrb[0].mxu0
        %1113 = vdwg.mxu0
        %v1114 = vld [vmem:[#allocation2] sm:$0xff]
        %v1115 = vld [vmem:[#allocation2 + $0x8] sm:$0xff]
        %v1116 = vld [vmem:[#allocation2 + $0x10] sm:$0xff]
        %v1117 = vld [vmem:[#allocation2 + $0x18] sm:$0xff]
        %v1118 = vld [vmem:[#allocation2 + $0x20] sm:$0xff]
        %v1119 = vld [vmem:[#allocation2 + $0x28] sm:$0xff]
        %v1120 = vadd.f32 %v1114, %v1092
        %v1121 = vadd.f32 %v1115, %v1095
        %v1122 = vadd.f32 %v1116, %v1100
        %v1123 = vadd.f32 %v1117, %v1103
        %v1124 = vadd.f32 %v1118, %v1108
        %v1125 = vadd.f32 %v1119, %v1111
        %1126 = vst [vmem:[#allocation2] sm:$0xff] %v1120
        %1127 = vst [vmem:[#allocation2 + $0x8] sm:$0xff] %v1121
        %1128 = vst [vmem:[#allocation2 + $0x10] sm:$0xff] %v1122
        %1129 = vst [vmem:[#allocation2 + $0x18] sm:$0xff] %v1123
        %1130 = vst [vmem:[#allocation2 + $0x20] sm:$0xff] %v1124
        %1131 = vst [vmem:[#allocation2 + $0x28] sm:$0xff] %v1125
        %v1132 = vld [vmem:[%s206 + $0x4] sm:$0xf]
        %v1133 = vld [vmem:[%s206 + $0x8] sm:$0xf]
        %v1134 = vld [vmem:[%s206 + $0xc] sm:$0xf]
        %v1135 = vld [vmem:[%s206 + $0x10] sm:$0xf]
        %v1136 = vld [vmem:[%s206 + $0x14] sm:$0xf]
        %v1137 = vld [vmem:[%s206 + $0x18] sm:$0xf]
        %v1138 = vld [vmem:[%s206 + $0x1c] sm:$0x1]
        %s1139 = scalar_lea.vmem [#allocation6], 320
        %v1140 = vld [vmem:[%s1139] sm:$0xf]
        %v1141 = vld [vmem:[%s1139 + $0x4] sm:$0xf]
        %v1142 = vld [vmem:[%s1139 + $0x8] sm:$0xf]
        %v1143 = vld [vmem:[%s1139 + $0xc] sm:$0xf]
        %v1144 = vld [vmem:[%s1139 + $0x10] sm:$0xf]
        %v1145 = vld [vmem:[%s1139 + $0x14] sm:$0xf]
        %v1146 = vld [vmem:[%s1139 + $0x18] sm:$0xf]
        %v1147 = vld [vmem:[%s1139 + $0x1c] sm:$0xf]
        %v1148 = vld [vmem:[%s1139 + $0x20] sm:$0xf]
        %v1149 = vld [vmem:[%s1139 + $0x24] sm:$0xf]
        %v1150 = vld [vmem:[%s1139 + $0x28] sm:$0xf]
        %v1151 = vld [vmem:[%s1139 + $0x2c] sm:$0xf]
        %v1152 = vld [vmem:[%s1139 + $0x30] sm:$0xf]
        %v1153 = vld [vmem:[%s1139 + $0x34] sm:$0xf]
        %v1154 = vld [vmem:[%s1139 + $0x38] sm:$0xf]
        %v1155 = vld [vmem:[%s1139 + $0x3c] sm:$0xf]
        %v1163 = vunpack.c.l.b16 %v1132
        %v1164 = vunpack.c.l.b16 %v1133
        %v1165 = vunpack.c.l.b16 %v1134
        %v1166 = vunpack.c.l.b16 %v1135
        %v1167 = vunpack.c.l.b16 %v1136
        %v1168 = vunpack.c.l.b16 %v1137
        %v1169 = vunpack.c.l.b16 %v1138
        %v1170 = vpack.c.b16 %v1164, %v1163
        %v1171 = vpack.c.b16 %v1166, %v1165
        %v1172 = vpack.c.b16 %v1168, %v1167
        %v1173 = vpack.c.b16 %v1169, %v1169
        %v1175 = vshrl.u32 %v1170, 16
        %v1177 = vshll.u32 %v1170, 16
        %v1179 = vrot.slane %v1177, 1
        %v1180 = vor.u32 %v1175, %v1179
        %v1182 = vshll.u32 %v1171, 16
        %v1184 = vrot.slane %v1182, 1
        %v1185 = vsel %vm433, %v1180, %v1184
        %v1186 = vshrl.u32 %v1171, 16
        %v1188 = vor.u32 %v1186, %v1184
        %v1190 = vshll.u32 %v1172, 16
        %v1192 = vrot.slane %v1190, 1
        %v1193 = vsel %vm433, %v1188, %v1192
        %v1194 = vshrl.u32 %v1172, 16
        %v1196 = vor.u32 %v1194, %v1192
        %v1198 = vshll.u32 %v1173, 16
        %v1200 = vrot.slane %v1198, 1
        %v1201 = vsel %vm433, %v1196, %v1200
        %v1221 = vunpack.c.l.b16 %v1140
        %v1222 = vunpack.c.l.b16 %v1141
        %v1223 = vunpack.c.l.b16 %v1142
        %v1224 = vunpack.c.l.b16 %v1143
        %v1225 = vunpack.c.l.b16 %v1144
        %v1226 = vunpack.c.l.b16 %v1145
        %v1227 = vunpack.c.l.b16 %v1146
        %v1228 = vunpack.c.l.b16 %v1147
        %v1229 = vunpack.c.l.b16 %v1148
        %v1230 = vunpack.c.l.b16 %v1149
        %v1231 = vunpack.c.l.b16 %v1150
        %v1232 = vunpack.c.l.b16 %v1151
        %v1233 = vunpack.c.l.b16 %v1152
        %v1234 = vunpack.c.l.b16 %v1153
        %v1235 = vunpack.c.l.b16 %v1154
        %v1236 = vunpack.c.l.b16 %v1155
        %v1237 = vpack.c.b16 %v1222, %v1221
        %v1238 = vpack.c.b16 %v1224, %v1223
        %v1239 = vpack.c.b16 %v1226, %v1225
        %v1240 = vpack.c.b16 %v1228, %v1227
        %v1241 = vpack.c.b16 %v1230, %v1229
        %v1242 = vpack.c.b16 %v1232, %v1231
        %v1243 = vpack.c.b16 %v1234, %v1233
        %v1244 = vpack.c.b16 %v1236, %v1235
        %1253 = vmatprep.subr.bf16.mxu0 0
        %1254 = vmatpush1.bf16.msra.mxu0 %v1237
        %1255 = vmatprep.subr.bf16.mxu0 0
        %1256 = vmatpush1.bf16.msra.mxu0 %v1238
        %1257 = vmatprep.subr.bf16.mxu0 0
        %1258 = vmatpush1.bf16.msra.mxu0 %v1239
        %1259 = vmatprep.subr.bf16.mxu0 0
        %1260 = vmatpush1.bf16.msra.mxu0 %v1240
        %1261 = vmatprep.subr.bf16.mxu0 0
        %1262 = vmatpush1.bf16.msra.mxu0 %v1241
        %1263 = vmatprep.subr.bf16.mxu0 0
        %1264 = vmatpush1.bf16.msra.mxu0 %v1242
        %1265 = vmatprep.subr.bf16.mxu0 0
        %1266 = vmatpush1.bf16.msra.mxu0 %v1243
        %1267 = vmatprep.subr.bf16.mxu0 0
        %1268 = vmatpush1.bf16.msra.mxu0 %v1244
        %1269 = vmatprep.subr.bf16.mxu0 0
        %1270 = vmatpush1.bf16.msra.mxu0 0
        %1271 = vmatprep.subr.bf16.mxu0 0
        %1272 = vmatpush1.bf16.msra.mxu0 0
        %1273 = vmatprep.subr.bf16.mxu0 0
        %1274 = vmatpush1.bf16.msra.mxu0 0
        %1275 = vmatprep.subr.bf16.mxu0 0
        %1276 = vmatpush1.bf16.msra.mxu0 0
        %1277 = vmatprep.subr.bf16.mxu0 0
        %1278 = vmatpush1.bf16.msra.mxu0 0
        %1279 = vmatprep.subr.bf16.mxu0 0
        %1280 = vmatpush1.bf16.msra.mxu0 0
        %1281 = vmatprep.subr.bf16.mxu0 0
        %1282 = vmatpush1.bf16.msra.mxu0 0
        %1283 = vmatprep.subr.bf16.mxu0 0
        %1284 = vmatpush1.bf16.msra.mxu0 0
        %1285 = vmatprep.mubr.bf16.mxu0 0
        %1286 = vmatmul.mubr.bf16.gmra.mrb[0].mxu0 %v1185
        %v1287 = vpop.f32.mrb[0].mxu0
        %v1288 = vadd.f32 0.0, %v1287
        %v1289 = vpop.f32.mrb[0].mxu0
        %v1290 = vpop.f32.mrb[0].mxu0
        %v1291 = vadd.f32 0.0, %v1290
        %v1292 = vpop.f32.mrb[0].mxu0
        %1293 = vmatprep.mubr.bf16.mxu0 0
        %1294 = vmatmul.mubr.bf16.gmra.mrb[0].mxu0 %v1193
        %v1295 = vpop.f32.mrb[0].mxu0
        %v1296 = vadd.f32 0.0, %v1295
        %v1297 = vpop.f32.mrb[0].mxu0
        %v1298 = vpop.f32.mrb[0].mxu0
        %v1299 = vadd.f32 0.0, %v1298
        %v1300 = vpop.f32.mrb[0].mxu0
        %1301 = vmatprep.mubr.bf16.mxu0 0
        %1302 = vmatmul.mubr.bf16.gmra.mrb[0].mxu0 %v1201
        %v1303 = vpop.f32.mrb[0].mxu0
        %v1304 = vadd.f32 0.0, %v1303
        %v1305 = vpop.f32.mrb[0].mxu0
        %v1306 = vpop.f32.mrb[0].mxu0
        %v1307 = vadd.f32 0.0, %v1306
        %v1308 = vpop.f32.mrb[0].mxu0
        %1309 = vdwg.mxu0
        %v1310 = vld [vmem:[#allocation2] sm:$0xff]
        %v1311 = vld [vmem:[#allocation2 + $0x8] sm:$0xff]
        %v1312 = vld [vmem:[#allocation2 + $0x10] sm:$0xff]
        %v1313 = vld [vmem:[#allocation2 + $0x18] sm:$0xff]
        %v1314 = vld [vmem:[#allocation2 + $0x20] sm:$0xff]
        %v1315 = vld [vmem:[#allocation2 + $0x28] sm:$0xff]
        %v1316 = vadd.f32 %v1310, %v1288
        %v1317 = vadd.f32 %v1311, %v1291
        %v1318 = vadd.f32 %v1312, %v1296
        %v1319 = vadd.f32 %v1313, %v1299
        %v1320 = vadd.f32 %v1314, %v1304
        %v1321 = vadd.f32 %v1315, %v1307
        %1322 = vst [vmem:[#allocation2] sm:$0xff] %v1316
        %1323 = vst [vmem:[#allocation2 + $0x8] sm:$0xff] %v1317
        %1324 = vst [vmem:[#allocation2 + $0x10] sm:$0xff] %v1318
        %1325 = vst [vmem:[#allocation2 + $0x18] sm:$0xff] %v1319
        %1326 = vst [vmem:[#allocation2 + $0x20] sm:$0xff] %v1320
        %1327 = vst [vmem:[#allocation2 + $0x28] sm:$0xff] %v1321
        %v1328 = vld [vmem:[%s206 + $0x4] sm:$0x8]
        %v1329 = vld [vmem:[%s206 + $0x8] sm:$0xf]
        %v1330 = vld [vmem:[%s206 + $0xc] sm:$0xf]
        %v1331 = vld [vmem:[%s206 + $0x10] sm:$0xf]
        %v1332 = vld [vmem:[%s206 + $0x14] sm:$0xf]
        %v1333 = vld [vmem:[%s206 + $0x18] sm:$0xf]
        %v1334 = vld [vmem:[%s206 + $0x1c] sm:$0x7]
        %s1335 = scalar_lea.vmem [#allocation6], 384
        %v1336 = vld [vmem:[%s1335] sm:$0xf]
        %v1337 = vld [vmem:[%s1335 + $0x4] sm:$0xf]
        %v1338 = vld [vmem:[%s1335 + $0x8] sm:$0xf]
        %v1339 = vld [vmem:[%s1335 + $0xc] sm:$0xf]
        %v1340 = vld [vmem:[%s1335 + $0x10] sm:$0xf]
        %v1341 = vld [vmem:[%s1335 + $0x14] sm:$0xf]
        %v1342 = vld [vmem:[%s1335 + $0x18] sm:$0xf]
        %v1343 = vld [vmem:[%s1335 + $0x1c] sm:$0xf]
        %v1344 = vld [vmem:[%s1335 + $0x20] sm:$0xf]
        %v1345 = vld [vmem:[%s1335 + $0x24] sm:$0xf]
        %v1346 = vld [vmem:[%s1335 + $0x28] sm:$0xf]
        %v1347 = vld [vmem:[%s1335 + $0x2c] sm:$0xf]
        %v1348 = vld [vmem:[%s1335 + $0x30] sm:$0xf]
        %v1349 = vld [vmem:[%s1335 + $0x34] sm:$0xf]
        %v1350 = vld [vmem:[%s1335 + $0x38] sm:$0xf]
        %v1351 = vld [vmem:[%s1335 + $0x3c] sm:$0xf]
        %v1359 = vunpack.c.l.b16 %v1328
        %v1360 = vunpack.c.l.b16 %v1329
        %v1361 = vunpack.c.l.b16 %v1330
        %v1362 = vunpack.c.l.b16 %v1331
        %v1363 = vunpack.c.l.b16 %v1332
        %v1364 = vunpack.c.l.b16 %v1333
        %v1365 = vunpack.c.l.b16 %v1334
        %v1366 = vpack.c.b16 %v1360, %v1359
        %v1367 = vpack.c.b16 %v1362, %v1361
        %v1368 = vpack.c.b16 %v1364, %v1363
        %v1369 = vpack.c.b16 %v1365, %v1365
        %vm1370 = vcmask 1044480
        %v1371 = vrot.slane %v1366, 3
        %v1372 = vrot.slane %v1367, 3
        %v1373 = vsel %vm1370, %v1371, %v1372
        %v1374 = vrot.slane %v1368, 3
        %v1375 = vsel %vm1370, %v1372, %v1374
        %v1376 = vrot.slane %v1369, 3
        %v1377 = vsel %vm1370, %v1374, %v1376
        %v1397 = vunpack.c.l.b16 %v1336
        %v1398 = vunpack.c.l.b16 %v1337
        %v1399 = vunpack.c.l.b16 %v1338
        %v1400 = vunpack.c.l.b16 %v1339
        %v1401 = vunpack.c.l.b16 %v1340
        %v1402 = vunpack.c.l.b16 %v1341
        %v1403 = vunpack.c.l.b16 %v1342
        %v1404 = vunpack.c.l.b16 %v1343
        %v1405 = vunpack.c.l.b16 %v1344
        %v1406 = vunpack.c.l.b16 %v1345
        %v1407 = vunpack.c.l.b16 %v1346
        %v1408 = vunpack.c.l.b16 %v1347
        %v1409 = vunpack.c.l.b16 %v1348
        %v1410 = vunpack.c.l.b16 %v1349
        %v1411 = vunpack.c.l.b16 %v1350
        %v1412 = vunpack.c.l.b16 %v1351
        %v1413 = vpack.c.b16 %v1398, %v1397
        %v1414 = vpack.c.b16 %v1400, %v1399
        %v1415 = vpack.c.b16 %v1402, %v1401
        %v1416 = vpack.c.b16 %v1404, %v1403
        %v1417 = vpack.c.b16 %v1406, %v1405
        %v1418 = vpack.c.b16 %v1408, %v1407
        %v1419 = vpack.c.b16 %v1410, %v1409
        %v1420 = vpack.c.b16 %v1412, %v1411
        %1429 = vmatprep.subr.bf16.mxu0 0
        %1430 = vmatpush1.bf16.msra.mxu0 %v1413
        %1431 = vmatprep.subr.bf16.mxu0 0
        %1432 = vmatpush1.bf16.msra.mxu0 %v1414
        %1433 = vmatprep.subr.bf16.mxu0 0
        %1434 = vmatpush1.bf16.msra.mxu0 %v1415
        %1435 = vmatprep.subr.bf16.mxu0 0
        %1436 = vmatpush1.bf16.msra.mxu0 %v1416
        %1437 = vmatprep.subr.bf16.mxu0 0
        %1438 = vmatpush1.bf16.msra.mxu0 %v1417
        %1439 = vmatprep.subr.bf16.mxu0 0
        %1440 = vmatpush1.bf16.msra.mxu0 %v1418
        %1441 = vmatprep.subr.bf16.mxu0 0
        %1442 = vmatpush1.bf16.msra.mxu0 %v1419
        %1443 = vmatprep.subr.bf16.mxu0 0
        %1444 = vmatpush1.bf16.msra.mxu0 %v1420
        %1445 = vmatprep.subr.bf16.mxu0 0
        %1446 = vmatpush1.bf16.msra.mxu0 0
        %1447 = vmatprep.subr.bf16.mxu0 0
        %1448 = vmatpush1.bf16.msra.mxu0 0
        %1449 = vmatprep.subr.bf16.mxu0 0
        %1450 = vmatpush1.bf16.msra.mxu0 0
        %1451 = vmatprep.subr.bf16.mxu0 0
        %1452 = vmatpush1.bf16.msra.mxu0 0
        %1453 = vmatprep.subr.bf16.mxu0 0
        %1454 = vmatpush1.bf16.msra.mxu0 0
        %1455 = vmatprep.subr.bf16.mxu0 0
        %1456 = vmatpush1.bf16.msra.mxu0 0
        %1457 = vmatprep.subr.bf16.mxu0 0
        %1458 = vmatpush1.bf16.msra.mxu0 0
        %1459 = vmatprep.subr.bf16.mxu0 0
        %1460 = vmatpush1.bf16.msra.mxu0 0
        %1461 = vmatprep.mubr.bf16.mxu0 0
        %1462 = vmatmul.mubr.bf16.gmra.mrb[0].mxu0 %v1373
        %v1463 = vpop.f32.mrb[0].mxu0
        %v1464 = vadd.f32 0.0, %v1463
        %v1465 = vpop.f32.mrb[0].mxu0
        %v1466 = vpop.f32.mrb[0].mxu0
        %v1467 = vadd.f32 0.0, %v1466
        %v1468 = vpop.f32.mrb[0].mxu0
        %1469 = vmatprep.mubr.bf16.mxu0 0
        %1470 = vmatmul.mubr.bf16.gmra.mrb[0].mxu0 %v1375
        %v1471 = vpop.f32.mrb[0].mxu0
        %v1472 = vadd.f32 0.0, %v1471
        %v1473 = vpop.f32.mrb[0].mxu0
        %v1474 = vpop.f32.mrb[0].mxu0
        %v1475 = vadd.f32 0.0, %v1474
        %v1476 = vpop.f32.mrb[0].mxu0
        %1477 = vmatprep.mubr.bf16.mxu0 0
        %1478 = vmatmul.mubr.bf16.gmra.mrb[0].mxu0 %v1377
        %v1479 = vpop.f32.mrb[0].mxu0
        %v1480 = vadd.f32 0.0, %v1479
        %v1481 = vpop.f32.mrb[0].mxu0
        %v1482 = vpop.f32.mrb[0].mxu0
        %v1483 = vadd.f32 0.0, %v1482
        %v1484 = vpop.f32.mrb[0].mxu0
        %1485 = vdwg.mxu0
        %v1486 = vld [vmem:[#allocation2] sm:$0xff]
        %v1487 = vld [vmem:[#allocation2 + $0x8] sm:$0xff]
        %v1488 = vld [vmem:[#allocation2 + $0x10] sm:$0xff]
        %v1489 = vld [vmem:[#allocation2 + $0x18] sm:$0xff]
        %v1490 = vld [vmem:[#allocation2 + $0x20] sm:$0xff]
        %v1491 = vld [vmem:[#allocation2 + $0x28] sm:$0xff]
        %v1492 = vadd.f32 %v1486, %v1464
        %v1493 = vadd.f32 %v1487, %v1467
        %v1494 = vadd.f32 %v1488, %v1472
        %v1495 = vadd.f32 %v1489, %v1475
        %v1496 = vadd.f32 %v1490, %v1480
        %v1497 = vadd.f32 %v1491, %v1483
        %1498 = vst [vmem:[#allocation2] sm:$0xff] %v1492
        %1499 = vst [vmem:[#allocation2 + $0x8] sm:$0xff] %v1493
        %1500 = vst [vmem:[#allocation2 + $0x10] sm:$0xff] %v1494
        %1501 = vst [vmem:[#allocation2 + $0x18] sm:$0xff] %v1495
        %1502 = vst [vmem:[#allocation2 + $0x20] sm:$0xff] %v1496
        %1503 = vst [vmem:[#allocation2 + $0x28] sm:$0xff] %v1497
        %v1504 = vld [vmem:[%s206 + $0x4] sm:$0x8]
        %v1505 = vld [vmem:[%s206 + $0x8] sm:$0xf]
        %v1506 = vld [vmem:[%s206 + $0xc] sm:$0xf]
        %v1507 = vld [vmem:[%s206 + $0x10] sm:$0xf]
        %v1508 = vld [vmem:[%s206 + $0x14] sm:$0xf]
        %v1509 = vld [vmem:[%s206 + $0x18] sm:$0xf]
        %v1510 = vld [vmem:[%s206 + $0x1c] sm:$0xf]
        %s1511 = scalar_lea.vmem [#allocation6], 448
        %v1512 = vld [vmem:[%s1511] sm:$0xf]
        %v1513 = vld [vmem:[%s1511 + $0x4] sm:$0xf]
        %v1514 = vld [vmem:[%s1511 + $0x8] sm:$0xf]
        %v1515 = vld [vmem:[%s1511 + $0xc] sm:$0xf]
        %v1516 = vld [vmem:[%s1511 + $0x10] sm:$0xf]
        %v1517 = vld [vmem:[%s1511 + $0x14] sm:$0xf]
        %v1518 = vld [vmem:[%s1511 + $0x18] sm:$0xf]
        %v1519 = vld [vmem:[%s1511 + $0x1c] sm:$0xf]
        %v1520 = vld [vmem:[%s1511 + $0x20] sm:$0xf]
        %v1521 = vld [vmem:[%s1511 + $0x24] sm:$0xf]
        %v1522 = vld [vmem:[%s1511 + $0x28] sm:$0xf]
        %v1523 = vld [vmem:[%s1511 + $0x2c] sm:$0xf]
        %v1524 = vld [vmem:[%s1511 + $0x30] sm:$0xf]
        %v1525 = vld [vmem:[%s1511 + $0x34] sm:$0xf]
        %v1526 = vld [vmem:[%s1511 + $0x38] sm:$0xf]
        %v1527 = vld [vmem:[%s1511 + $0x3c] sm:$0xf]
        %v1535 = vunpack.c.l.b16 %v1504
        %v1536 = vunpack.c.l.b16 %v1505
        %v1537 = vunpack.c.l.b16 %v1506
        %v1538 = vunpack.c.l.b16 %v1507
        %v1539 = vunpack.c.l.b16 %v1508
        %v1540 = vunpack.c.l.b16 %v1509
        %v1541 = vunpack.c.l.b16 %v1510
        %v1542 = vpack.c.b16 %v1536, %v1535
        %v1543 = vpack.c.b16 %v1538, %v1537
        %v1544 = vpack.c.b16 %v1540, %v1539
        %v1545 = vpack.c.b16 %v1541, %v1541
        %v1547 = vshrl.u32 %v1542, 16
        %v1549 = vrot.slane %v1547, 3
        %v1550 = vshll.u32 %v1542, 16
        %v1552 = vrot.slane %v1550, 4
        %v1553 = vor.u32 %v1549, %v1552
        %v1555 = vshrl.u32 %v1543, 16
        %v1557 = vrot.slane %v1555, 3
        %v1558 = vshll.u32 %v1543, 16
        %v1560 = vrot.slane %v1558, 4
        %v1561 = vor.u32 %v1557, %v1560
        %v1562 = vsel %vm806, %v1553, %v1561
        %v1564 = vshrl.u32 %v1544, 16
        %v1566 = vrot.slane %v1564, 3
        %v1567 = vshll.u32 %v1544, 16
        %v1569 = vrot.slane %v1567, 4
        %v1570 = vor.u32 %v1566, %v1569
        %v1571 = vsel %vm806, %v1561, %v1570
        %v1573 = vshrl.u32 %v1545, 16
        %v1575 = vrot.slane %v1573, 3
        %v1576 = vshll.u32 %v1545, 16
        %v1578 = vrot.slane %v1576, 4
        %v1579 = vor.u32 %v1575, %v1578
        %v1580 = vsel %vm806, %v1570, %v1579
        %v1600 = vunpack.c.l.b16 %v1512
        %v1601 = vunpack.c.l.b16 %v1513
        %v1602 = vunpack.c.l.b16 %v1514
        %v1603 = vunpack.c.l.b16 %v1515
        %v1604 = vunpack.c.l.b16 %v1516
        %v1605 = vunpack.c.l.b16 %v1517
        %v1606 = vunpack.c.l.b16 %v1518
        %v1607 = vunpack.c.l.b16 %v1519
        %v1608 = vunpack.c.l.b16 %v1520
        %v1609 = vunpack.c.l.b16 %v1521
        %v1610 = vunpack.c.l.b16 %v1522
        %v1611 = vunpack.c.l.b16 %v1523
        %v1612 = vunpack.c.l.b16 %v1524
        %v1613 = vunpack.c.l.b16 %v1525
        %v1614 = vunpack.c.l.b16 %v1526
        %v1615 = vunpack.c.l.b16 %v1527
        %v1616 = vpack.c.b16 %v1601, %v1600
        %v1617 = vpack.c.b16 %v1603, %v1602
        %v1618 = vpack.c.b16 %v1605, %v1604
        %v1619 = vpack.c.b16 %v1607, %v1606
        %v1620 = vpack.c.b16 %v1609, %v1608
        %v1621 = vpack.c.b16 %v1611, %v1610
        %v1622 = vpack.c.b16 %v1613, %v1612
        %v1623 = vpack.c.b16 %v1615, %v1614
        %1632 = vmatprep.subr.bf16.mxu0 0
        %1633 = vmatpush1.bf16.msra.mxu0 %v1616
        %1634 = vmatprep.subr.bf16.mxu0 0
        %1635 = vmatpush1.bf16.msra.mxu0 %v1617
        %1636 = vmatprep.subr.bf16.mxu0 0
        %1637 = vmatpush1.bf16.msra.mxu0 %v1618
        %1638 = vmatprep.subr.bf16.mxu0 0
        %1639 = vmatpush1.bf16.msra.mxu0 %v1619
        %1640 = vmatprep.subr.bf16.mxu0 0
        %1641 = vmatpush1.bf16.msra.mxu0 %v1620
        %1642 = vmatprep.subr.bf16.mxu0 0
        %1643 = vmatpush1.bf16.msra.mxu0 %v1621
        %1644 = vmatprep.subr.bf16.mxu0 0
        %1645 = vmatpush1.bf16.msra.mxu0 %v1622
        %1646 = vmatprep.subr.bf16.mxu0 0
        %1647 = vmatpush1.bf16.msra.mxu0 %v1623
        %1648 = vmatprep.subr.bf16.mxu0 0
        %1649 = vmatpush1.bf16.msra.mxu0 0
        %1650 = vmatprep.subr.bf16.mxu0 0
        %1651 = vmatpush1.bf16.msra.mxu0 0
        %1652 = vmatprep.subr.bf16.mxu0 0
        %1653 = vmatpush1.bf16.msra.mxu0 0
        %1654 = vmatprep.subr.bf16.mxu0 0
        %1655 = vmatpush1.bf16.msra.mxu0 0
        %1656 = vmatprep.subr.bf16.mxu0 0
        %1657 = vmatpush1.bf16.msra.mxu0 0
        %1658 = vmatprep.subr.bf16.mxu0 0
        %1659 = vmatpush1.bf16.msra.mxu0 0
        %1660 = vmatprep.subr.bf16.mxu0 0
        %1661 = vmatpush1.bf16.msra.mxu0 0
        %1662 = vmatprep.subr.bf16.mxu0 0
        %1663 = vmatpush1.bf16.msra.mxu0 0
        %1664 = vmatprep.mubr.bf16.mxu0 0
        %1665 = vmatmul.mubr.bf16.gmra.mrb[0].mxu0 %v1562
        %v1666 = vpop.f32.mrb[0].mxu0
        %v1667 = vadd.f32 0.0, %v1666
        %v1668 = vpop.f32.mrb[0].mxu0
        %v1669 = vpop.f32.mrb[0].mxu0
        %v1670 = vadd.f32 0.0, %v1669
        %v1671 = vpop.f32.mrb[0].mxu0
        %1672 = vmatprep.mubr.bf16.mxu0 0
        %1673 = vmatmul.mubr.bf16.gmra.mrb[0].mxu0 %v1571
        %v1674 = vpop.f32.mrb[0].mxu0
        %v1675 = vadd.f32 0.0, %v1674
        %v1676 = vpop.f32.mrb[0].mxu0
        %v1677 = vpop.f32.mrb[0].mxu0
        %v1678 = vadd.f32 0.0, %v1677
        %v1679 = vpop.f32.mrb[0].mxu0
        %1680 = vmatprep.mubr.bf16.mxu0 0
        %1681 = vmatmul.mubr.bf16.gmra.mrb[0].mxu0 %v1580
        %v1682 = vpop.f32.mrb[0].mxu0
        %v1683 = vadd.f32 0.0, %v1682
        %v1684 = vpop.f32.mrb[0].mxu0
        %v1685 = vpop.f32.mrb[0].mxu0
        %v1686 = vadd.f32 0.0, %v1685
        %v1687 = vpop.f32.mrb[0].mxu0
        %1688 = vdwg.mxu0
        %v1689 = vld [vmem:[#allocation2] sm:$0xff]
        %v1690 = vld [vmem:[#allocation2 + $0x8] sm:$0xff]
        %v1691 = vld [vmem:[#allocation2 + $0x10] sm:$0xff]
        %v1692 = vld [vmem:[#allocation2 + $0x18] sm:$0xff]
        %v1693 = vld [vmem:[#allocation2 + $0x20] sm:$0xff]
        %v1694 = vld [vmem:[#allocation2 + $0x28] sm:$0xff]
        %v1695 = vadd.f32 %v1689, %v1667
        %v1696 = vadd.f32 %v1690, %v1670
        %v1697 = vadd.f32 %v1691, %v1675
        %v1698 = vadd.f32 %v1692, %v1678
        %v1699 = vadd.f32 %v1693, %v1683
        %v1700 = vadd.f32 %v1694, %v1686
        %1701 = vst [vmem:[#allocation2] sm:$0xff] %v1695
        %1702 = vst [vmem:[#allocation2 + $0x8] sm:$0xff] %v1696
        %1703 = vst [vmem:[#allocation2 + $0x10] sm:$0xff] %v1697
        %1704 = vst [vmem:[#allocation2 + $0x18] sm:$0xff] %v1698
        %1705 = vst [vmem:[#allocation2 + $0x20] sm:$0xff] %v1699
        %1706 = vst [vmem:[#allocation2 + $0x28] sm:$0xff] %v1700
        %v1707 = vld [vmem:[%s206 + $0x8] sm:$0xf]
        %v1708 = vld [vmem:[%s206 + $0xc] sm:$0xf]
        %v1709 = vld [vmem:[%s206 + $0x10] sm:$0xf]
        %v1710 = vld [vmem:[%s206 + $0x14] sm:$0xf]
        %v1711 = vld [vmem:[%s206 + $0x18] sm:$0xf]
        %v1712 = vld [vmem:[%s206 + $0x1c] sm:$0xf]
        %s1713 = scalar_lea.vmem [#allocation6], 512
        %v1714 = vld [vmem:[%s1713] sm:$0xf]
        %v1715 = vld [vmem:[%s1713 + $0x4] sm:$0xf]
        %v1716 = vld [vmem:[%s1713 + $0x8] sm:$0xf]
        %v1717 = vld [vmem:[%s1713 + $0xc] sm:$0xf]
        %v1718 = vld [vmem:[%s1713 + $0x10] sm:$0xf]
        %v1719 = vld [vmem:[%s1713 + $0x14] sm:$0xf]
        %v1720 = vld [vmem:[%s1713 + $0x18] sm:$0xf]
        %v1721 = vld [vmem:[%s1713 + $0x1c] sm:$0xf]
        %v1722 = vld [vmem:[%s1713 + $0x20] sm:$0xf]
        %v1723 = vld [vmem:[%s1713 + $0x24] sm:$0xf]
        %v1724 = vld [vmem:[%s1713 + $0x28] sm:$0xf]
        %v1725 = vld [vmem:[%s1713 + $0x2c] sm:$0xf]
        %v1726 = vld [vmem:[%s1713 + $0x30] sm:$0xf]
        %v1727 = vld [vmem:[%s1713 + $0x34] sm:$0xf]
        %v1728 = vld [vmem:[%s1713 + $0x38] sm:$0xf]
        %v1729 = vld [vmem:[%s1713 + $0x3c] sm:$0xf]
        %v1736 = vunpack.c.l.b16 %v1707
        %v1737 = vunpack.c.l.b16 %v1708
        %v1738 = vunpack.c.l.b16 %v1709
        %v1739 = vunpack.c.l.b16 %v1710
        %v1740 = vunpack.c.l.b16 %v1711
        %v1741 = vunpack.c.l.b16 %v1712
        %v1742 = vpack.c.b16 %v1737, %v1736
        %v1743 = vpack.c.b16 %v1739, %v1738
        %v1744 = vpack.c.b16 %v1741, %v1740
        %v1764 = vunpack.c.l.b16 %v1714
        %v1765 = vunpack.c.l.b16 %v1715
        %v1766 = vunpack.c.l.b16 %v1716
        %v1767 = vunpack.c.l.b16 %v1717
        %v1768 = vunpack.c.l.b16 %v1718
        %v1769 = vunpack.c.l.b16 %v1719
        %v1770 = vunpack.c.l.b16 %v1720
        %v1771 = vunpack.c.l.b16 %v1721
        %v1772 = vunpack.c.l.b16 %v1722
        %v1773 = vunpack.c.l.b16 %v1723
        %v1774 = vunpack.c.l.b16 %v1724
        %v1775 = vunpack.c.l.b16 %v1725
        %v1776 = vunpack.c.l.b16 %v1726
        %v1777 = vunpack.c.l.b16 %v1727
        %v1778 = vunpack.c.l.b16 %v1728
        %v1779 = vunpack.c.l.b16 %v1729
        %v1780 = vpack.c.b16 %v1765, %v1764
        %v1781 = vpack.c.b16 %v1767, %v1766
        %v1782 = vpack.c.b16 %v1769, %v1768
        %v1783 = vpack.c.b16 %v1771, %v1770
        %v1784 = vpack.c.b16 %v1773, %v1772
        %v1785 = vpack.c.b16 %v1775, %v1774
        %v1786 = vpack.c.b16 %v1777, %v1776
        %v1787 = vpack.c.b16 %v1779, %v1778
        %1796 = vmatprep.subr.bf16.mxu0 0
        %1797 = vmatpush1.bf16.msra.mxu0 %v1780
        %1798 = vmatprep.subr.bf16.mxu0 0
        %1799 = vmatpush1.bf16.msra.mxu0 %v1781
        %1800 = vmatprep.subr.bf16.mxu0 0
        %1801 = vmatpush1.bf16.msra.mxu0 %v1782
        %1802 = vmatprep.subr.bf16.mxu0 0
        %1803 = vmatpush1.bf16.msra.mxu0 %v1783
        %1804 = vmatprep.subr.bf16.mxu0 0
        %1805 = vmatpush1.bf16.msra.mxu0 %v1784
        %1806 = vmatprep.subr.bf16.mxu0 0
        %1807 = vmatpush1.bf16.msra.mxu0 %v1785
        %1808 = vmatprep.subr.bf16.mxu0 0
        %1809 = vmatpush1.bf16.msra.mxu0 %v1786
        %1810 = vmatprep.subr.bf16.mxu0 0
        %1811 = vmatpush1.bf16.msra.mxu0 %v1787
        %1812 = vmatprep.subr.bf16.mxu0 0
        %1813 = vmatpush1.bf16.msra.mxu0 0
        %1814 = vmatprep.subr.bf16.mxu0 0
        %1815 = vmatpush1.bf16.msra.mxu0 0
        %1816 = vmatprep.subr.bf16.mxu0 0
        %1817 = vmatpush1.bf16.msra.mxu0 0
        %1818 = vmatprep.subr.bf16.mxu0 0
        %1819 = vmatpush1.bf16.msra.mxu0 0
        %1820 = vmatprep.subr.bf16.mxu0 0
        %1821 = vmatpush1.bf16.msra.mxu0 0
        %1822 = vmatprep.subr.bf16.mxu0 0
        %1823 = vmatpush1.bf16.msra.mxu0 0
        %1824 = vmatprep.subr.bf16.mxu0 0
        %1825 = vmatpush1.bf16.msra.mxu0 0
        %1826 = vmatprep.subr.bf16.mxu0 0
        %1827 = vmatpush1.bf16.msra.mxu0 0
        %1828 = vmatprep.mubr.bf16.mxu0 0
        %1829 = vmatmul.mubr.bf16.gmra.mrb[0].mxu0 %v1742
        %v1830 = vpop.f32.mrb[0].mxu0
        %v1831 = vadd.f32 0.0, %v1830
        %v1832 = vpop.f32.mrb[0].mxu0
        %v1833 = vpop.f32.mrb[0].mxu0
        %v1834 = vadd.f32 0.0, %v1833
        %v1835 = vpop.f32.mrb[0].mxu0
        %1836 = vmatprep.mubr.bf16.mxu0 0
        %1837 = vmatmul.mubr.bf16.gmra.mrb[0].mxu0 %v1743
        %v1838 = vpop.f32.mrb[0].mxu0
        %v1839 = vadd.f32 0.0, %v1838
        %v1840 = vpop.f32.mrb[0].mxu0
        %v1841 = vpop.f32.mrb[0].mxu0
        %v1842 = vadd.f32 0.0, %v1841
        %v1843 = vpop.f32.mrb[0].mxu0
        %1844 = vmatprep.mubr.bf16.mxu0 0
        %1845 = vmatmul.mubr.bf16.gmra.mrb[0].mxu0 %v1744
        %v1846 = vpop.f32.mrb[0].mxu0
        %v1847 = vadd.f32 0.0, %v1846
        %v1848 = vpop.f32.mrb[0].mxu0
        %v1849 = vpop.f32.mrb[0].mxu0
        %v1850 = vadd.f32 0.0, %v1849
        %v1851 = vpop.f32.mrb[0].mxu0
        %1852 = vdwg.mxu0
        %v1853 = vld [vmem:[#allocation2] sm:$0xff]
        %v1854 = vld [vmem:[#allocation2 + $0x8] sm:$0xff]
        %v1855 = vld [vmem:[#allocation2 + $0x10] sm:$0xff]
        %v1856 = vld [vmem:[#allocation2 + $0x18] sm:$0xff]
        %v1857 = vld [vmem:[#allocation2 + $0x20] sm:$0xff]
        %v1858 = vld [vmem:[#allocation2 + $0x28] sm:$0xff]
        %v1859 = vadd.f32 %v1853, %v1831
        %v1860 = vadd.f32 %v1854, %v1834
        %v1861 = vadd.f32 %v1855, %v1839
        %v1862 = vadd.f32 %v1856, %v1842
        %v1863 = vadd.f32 %v1857, %v1847
        %v1864 = vadd.f32 %v1858, %v1850
        %1865 = vst [vmem:[#allocation2] sm:$0xff] %v1859
        %1866 = vst [vmem:[#allocation2 + $0x8] sm:$0xff] %v1860
        %1867 = vst [vmem:[#allocation2 + $0x10] sm:$0xff] %v1861
        %1868 = vst [vmem:[#allocation2 + $0x18] sm:$0xff] %v1862
        %1869 = vst [vmem:[#allocation2 + $0x20] sm:$0xff] %v1863
        %1870 = vst [vmem:[#allocation2 + $0x28] sm:$0xff] %v1864
        %v1871 = vld [vmem:[#allocation2] sm:$0xff]
        %v1872 = vld [vmem:[#allocation2 + $0x8] sm:$0xff]
        %v1873 = vld [vmem:[#allocation2 + $0x10] sm:$0xff]
        %v1874 = vld [vmem:[#allocation2 + $0x18] sm:$0xff]
        %v1875 = vld [vmem:[#allocation2 + $0x20] sm:$0xff]
        %v1876 = vld [vmem:[#allocation2 + $0x28] sm:$0xff]
        %v1877 = vld [vmem:[%s238] sm:$0x1]
        %v1879 = vlaneseq
        %v1880 = vshrl.u32 %v1879, 7
        %v1881 = vsub.s32 0, %v1880
        %v1882 = vrot.slane %v1877, %v1881
        %v1884 = vadd.f32 %v1871, %v1882
        %v1885 = vadd.f32 %v1872, %v1882
        %v1886 = vadd.f32 %v1873, %v1882
        %v1887 = vadd.f32 %v1874, %v1882
        %v1888 = vadd.f32 %v1875, %v1882
        %v1889 = vadd.f32 %v1876, %v1882
        %v1890 = vmax.f32 %v1884, 0.0
        %v1891 = vmax.f32 %v1885, 0.0
        %v1892 = vmax.f32 %v1886, 0.0
        %v1893 = vmax.f32 %v1887, 0.0
        %v1894 = vmax.f32 %v1888, 0.0
        %v1895 = vmax.f32 %v1889, 0.0
        %v1896 = vpack.c.bf16 %v1891, %v1890
        %v1897 = vpack.c.bf16 %v1893, %v1892
        %v1898 = vpack.c.bf16 %v1895, %v1894
        %v1902 = vunpack.c.l.b16 %v1896
        %v1903 = vunpack.c.h.b16 %v1896
        %v1904 = vunpack.c.l.b16 %v1897
        %v1905 = vunpack.c.h.b16 %v1897
        %v1906 = vunpack.c.l.b16 %v1898
        %v1907 = vunpack.c.h.b16 %v1898
        %v1908 = vpack.c.b16 %v1902, %v1902
        %v1909 = vpack.c.b16 %v1903, %v1903
        %v1910 = vpack.c.b16 %v1904, %v1904
        %v1911 = vpack.c.b16 %v1905, %v1905
        %v1912 = vpack.c.b16 %v1906, %v1906
        %v1913 = vpack.c.b16 %v1907, %v1907
        %1920 = vst [vmem:[%s235] sm:$0xf] %v1908
        %1921 = vst [vmem:[%s235 + $0x4] sm:$0xf] %v1909
        %1922 = vst [vmem:[%s235 + $0x8] sm:$0xf] %v1910
        %1923 = vst [vmem:[%s235 + $0xc] sm:$0xf] %v1911
        %1924 = vst [vmem:[%s235 + $0x10] sm:$0xf] %v1912
        %1925 = vst [vmem:[%s235 + $0x14] sm:$0xf] %v1913
        %s1926 = sand.u32 %s121, 1
        %s1927 = scalar_lea.sflag [#allocation5], %s1926
        %s1928 = sand.u32 %s121, 1
        %s1929 = smul.addr %s1928, 24
        %s1930 = scalar_lea.vmem [#allocation8], %s1929
        // Predicated region
        $region41: #{tpu_custom_call.1} parent=31 // pred_check
          %p1931 = pneg %p131
        $region42: #{tpu_custom_call.1} parent=31 // pred_check_branch
          %1933 = sbr.rel (%p1931) target = $region44
        $region43: #{tpu_custom_call.1} parent=31 // pred_region
          %s1935 = ssub.s32 384, 384
          %1936 = vsyncadd %s1927, %s1935
          %s1937 = smul.addr %s25, 6
          %s1938 = sadd.s32 %s26, %s1937
          %s1939 = smul.addr %s1938, 64
          %s1940 = scalar_lea.hbm %s3, %s1939
          %s1941 = sshll.u32 %s1930, 4
          %s1942 = int_to_ptr.vmem [resolvable:$true] %s1941
          %1947 = dma.vmem_to_hbm [thread:$0]  %s1942, 384, %s1940, %s1927, 64, 64, 4
        $region44: #{tpu_custom_call.1} parent=31 // pred_fallthru
          _
      $region32: #{tpu_custom_call.1} parent=5 // pred_fallthru
        _
      %p1948 = scmp.le.s32.totalorder 2, %s16
      // Predicated region
      $region45: #{tpu_custom_call.1} parent=5 // pred_check
        %p1949 = pneg %p1948
      $region46: #{tpu_custom_call.1} parent=5 // pred_check_branch
        %1951 = sbr.rel (%p1949) target = $region48
      $region47: #{tpu_custom_call.1} parent=5 // pred_region
        %s1952 = ssub.s32 %s16, 2
        // Predicated region
        $region49: #{tpu_custom_call.1} parent=47 // pred_check
          %p1953 = pneg %p137
        $region50: #{tpu_custom_call.1} parent=47 // pred_check_branch
          %1955 = sbr.rel (%p1953) target = $region52
        $region51: #{tpu_custom_call.1} parent=47 // pred_region
          %s1956 = sand.u32 %s122, 1
          %s1957 = scalar_lea.sflag [#allocation5], %s1956
          %s1958 = sand.u32 %s122, 1
          %s1959 = smul.addr %s1958, 24
          %s1960 = scalar_lea.vmem [#allocation8], %s1959
          %1961 = dma.done %s1957, 384
        $region52: #{tpu_custom_call.1} parent=47 // pred_fallthru
          _
      $region48: #{tpu_custom_call.1} parent=5 // pred_fallthru
        _
    $region6: #{tpu_custom_call.1} parent=1 // loop_footer
      %s20 = sadd.s32 1, %s16
    $region7: #{tpu_custom_call.1} parent=1 // loop_footer_branch
      %15 = sbr.rel target = $region3
    $region8: #{tpu_custom_call.1} parent=1 // loop_exit
      _
    %1962 = vsyncpa [#allocation4], 1
    %s1963 = scalar_lea.sflag [#allocation4], 1
    %1964 = vsyncpa %s1963, 1
    %1965 = vsyncpa [#allocation7], 1
    %1966 = vsyncpa [#allocation5], 1
    %s1967 = scalar_lea.sflag [#allocation5], 1
    %1968 = vsyncpa %s1967, 1

</llo_original>
